<compile_context>
chip_gen: v7x
topology: tpu7x:2x2x1
jax: 0.10.0
libtpu: 0.0.40
codegen_flags: <defaults>
</compile_context>

<pallas_src>
import jax
import jax.numpy as jnp
import numpy as np
from jax.experimental import pallas as pl
from jax.experimental.pallas import tpu as pltpu

LEAKY_SLOPE = 0.2
BN_EPS = 1e-5
C = 128  # conv channel count == TPU lane count


def _shift_down(a):
    """Row j <- row j-1; zero row at the top (the conv left padding)."""
    z = jnp.zeros((1, a.shape[1]), a.dtype)
    return jnp.concatenate([z, a[:-1, :]], axis=0)


# ------------------------------ fused kernel --------------------------------

def fused_discriminator_kernel(x_ref, w1m_ref, w1s_ref, b1_ref, w2_ref, b2_ref,
                               w3_ref, b3_ref, bns_ref, bnh_ref,
                               fcw_ref, fcb_ref, out_ref):
    L8 = x_ref.shape[1]
    n_classes = out_ref.shape[2]

    bn_scale = bns_ref[...]            # (1, C) = gamma * rsqrt(var + eps)
    bn_shift = bnh_ref[...]            # (1, C) = beta - mean * scale

    def act_bn(y):                     # LeakyReLU(0.2) then eval-mode BatchNorm
        y = jnp.where(y >= 0.0, y, LEAKY_SLOPE * y)
        return y * bn_scale + bn_shift

    # --------- conv1: Conv1d(1, 128, k=3, s=2, p=1), polyphase on MXU -------
    # X[i, m] = x[8i + m]; Xs is X shifted down one row (supplies x[8i - 1]).
    X = x_ref[...].reshape(L8, 8)
    Xs = _shift_down(X)
    c1_all = (jnp.dot(X, w1m_ref[...], preferred_element_type=jnp.float32)
              + jnp.dot(Xs, w1s_ref[...], preferred_element_type=jnp.float32))
    b1 = b1_ref[...]
    # lanes [q*128:(q+1)*128] of c1_all hold conv1 output phase q (rows 4i+q)
    p0 = act_bn(c1_all[:, 0 * C:1 * C] + b1)
    p1 = act_bn(c1_all[:, 1 * C:2 * C] + b1)
    p2 = act_bn(c1_all[:, 2 * C:3 * C] + b1)
    p3 = act_bn(c1_all[:, 3 * C:4 * C] + b1)

    # ----- conv2 / conv3: Conv1d(128, 128, k=3, s=2, p=1) on the MXU --------
    cdt = w2_ref.dtype                 # compute dtype for matmul operands

    def mm(a, w_ref, t):               # (m, C) x (C, C) -> (m, C), f32 acc
        return jnp.dot(a.astype(cdt), w_ref[t],
                       preferred_element_type=jnp.float32)

    b2 = b2_ref[...]
    # conv2 output phase 0 (rows 2i)   and phase 1 (rows 2i+1):
    c2_0 = act_bn(mm(_shift_down(p3), w2_ref, 0) + mm(p0, w2_ref, 1)
                  + mm(p1, w2_ref, 2) + b2)
    c2_1 = act_bn(mm(p1, w2_ref, 0) + mm(p2, w2_ref, 1)
                  + mm(p3, w2_ref, 2) + b2)

    # conv3 output (length L/8):
    c3 = act_bn(mm(_shift_down(c2_1), w3_ref, 0) + mm(c2_0, w3_ref, 1)
                + mm(c2_1, w3_ref, 2) + b3_ref[...])

    # ---- flatten (folded into FC weight layout) + Linear(fc_in, n_classes) -
    # TODO(synk): nn.Dropout(0.4) is an eval-mode identity here (training-mode
    # PyTorch RNG mask is not reproducible in Pallas).
    fcw = fcw_ref[...]                 # (n_classes, L8, C)
    fcb = fcb_ref[...]                 # (1, n_classes)
    res = jnp.zeros((1, n_classes), jnp.float32)
    lane_id = jax.lax.broadcasted_iota(jnp.int32, (1, n_classes), 1)
    for n in range(n_classes):         # n_classes is tiny (default 1)
        s = jnp.sum(c3 * fcw[n])       # VPU mul + full reduce (no MXU)
        res = res + jnp.where(lane_id == n, s, 0.0)
    out_ref[...] = (res + fcb).reshape(1, 1, n_classes)


# --------------------- one-time parameter preparation -----------------------

def prepare_params(params, compute_dtype=jnp.float32):
    """Hoist all weight transposes/reshapes + BN folding out of the forward."""
    prep = {}

    # conv1 -> two (8, 4C) polyphase matrices (tap weights placed per phase).
    w1 = np.asarray(params["w1"], np.float32)            # (C, 1, 3)
    wt = w1[:, 0, :].T                                   # (3, C): wt[t]
    w1m = np.zeros((8, 4 * C), np.float32)
    w1s = np.zeros((8, 4 * C), np.float32)
    #                 tap0 tap1 tap2   (None => x[8i-1], comes from shifted X)
    tap_rows = [(None, 0, 1), (1, 2, 3), (3, 4, 5), (5, 6, 7)]
    for q, rows in enumerate(tap_rows):
        for t, r in enumerate(rows):
            if r is None:
                w1s[7, q * C:(q + 1) * C] = wt[t]
            else:
                w1m[r, q * C:(q + 1) * C] = wt[t]
    prep["w1_main"] = jnp.asarray(w1m)                   # conv1 stays f32
    prep["w1_shift"] = jnp.asarray(w1s)
    prep["b1"] = params["b1"].reshape(1, C).astype(jnp.float32)

    for i in (2, 3):
        w = jnp.asarray(params[f"w{i}"], jnp.float32)    # (C_out, C_in, 3)
        prep[f"w{i}"] = jnp.transpose(w, (2, 1, 0)).astype(compute_dtype)  # (3, C_in, C_out)
        prep[f"b{i}"] = params[f"b{i}"].reshape(1, C).astype(jnp.float32)

    scale = params["bn_gamma"] * jax.lax.rsqrt(params["bn_var"] + BN_EPS)
    shift = params["bn_beta"] - params["bn_mean"] * scale
    prep["bn_scale"] = scale.reshape(1, C).astype(jnp.float32)
    prep["bn_shift"] = shift.reshape(1, C).astype(jnp.float32)

    n_classes, fc_in = params["fc_w"].shape
    l8 = fc_in // C
    # PyTorch flatten is channel-major (c * L8 + l); pre-permute to (n, l, c)
    # so the in-kernel (L8, C) activation multiplies it directly.
    prep["fc_w"] = jnp.transpose(
        params["fc_w"].reshape(n_classes, C, l8), (0, 2, 1)).astype(jnp.float32)
    prep["fc_b"] = params["fc_b"].reshape(1, n_classes).astype(jnp.float32)
    return prep


# ------------------------------- forward ------------------------------------

def discriminator_forward(prep, x_ncw):
    """x_ncw: (B, 1, L) float32 -- same layout as the PyTorch module input."""
    B, _, L = x_ncw.shape
    assert L % 8 == 0 and L >= 16, "Discriminator needs input_shape % 8 == 0, >= 16"
    L8 = L // 8
    n_classes = prep["fc_b"].shape[1]
    assert prep["fc_w"].shape == (n_classes, L8, C)

    # (B, 1, L) -> (B, L/8, 8): free row-major reshape (phase m = x[8i + m]).
    x = x_ncw.reshape(B, L8, 8).astype(jnp.float32)

    def resident(a):                   # whole array, fetched once, VMEM-resident
        nd = a.ndim
        return pl.BlockSpec(a.shape, lambda b, _nd=nd: (0,) * _nd)

    param_order = ("w1_main", "w1_shift", "b1", "w2", "b2", "w3", "b3",
                   "bn_scale", "bn_shift", "fc_w", "fc_b")
    in_specs = [pl.BlockSpec((1, L8, 8), lambda b: (b, 0, 0))]
    in_specs += [resident(prep[k]) for k in param_order]

    out = pl.pallas_call(
        fused_discriminator_kernel,
        out_shape=jax.ShapeDtypeStruct((B, 1, n_classes), jnp.float32),
        grid_spec=pltpu.PrefetchScalarGridSpec(
            num_scalar_prefetch=0,
            grid=(B,),
            in_specs=in_specs,
            out_specs=pl.BlockSpec((1, 1, n_classes), lambda b: (b, 0, 0)),
        ),
        compiler_params=pltpu.CompilerParams(
            dimension_semantics=("parallel",)),   # megacore split over batch
    )(x, *[prep[k] for k in param_order])
    return out.reshape(B, n_classes)


# ------------------------------ param init ----------------------------------

def init_params(key, input_shape, n_classes=1):
    ks = jax.random.split(key, 12)

    def nrm(k, shape, scale):
        return scale * jax.random.normal(k, shape, dtype=jnp.float32)

    p = {}
    p["w1"] = nrm(ks[0], (C, 1, 3), 0.3)
    p["b1"] = nrm(ks[1], (C,), 0.1)
    p["w2"] = nrm(ks[2], (C, C, 3), 0.05)
    p["b2"] = nrm(ks[3], (C,), 0.1)
    p["w3"] = nrm(ks[4], (C, C, 3), 0.05)
    p["b3"] = nrm(ks[5], (C,), 0.1)
    # Single shared BatchNorm1d(128) module (applied 3x) -- eval running stats.
    p["bn_gamma"] = 1.0 + nrm(ks[6], (C,), 0.1)
    p["bn_beta"] = nrm(ks[7], (C,), 0.1)
    p["bn_mean"] = nrm(ks[8], (C,), 0.1)
    p["bn_var"] = 1.0 + 0.5 * jax.nn.sigmoid(
        jax.random.normal(ks[9], (C,), dtype=jnp.float32))
    fc_in = input_shape // 8 * C
    p["fc_w"] = nrm(ks[10], (n_classes, fc_in), 0.05)   # PyTorch Linear (out, in)
    p["fc_b"] = nrm(ks[11], (n_classes,), 0.1)
    return p


# --------------------------- plain-JAX reference ----------------------------

def reference_forward(params, x_ncw):
    def conv1d(x, w, b):
        y = jax.lax.conv_general_dilated(
            x, w, window_strides=(2,), padding=[(1, 1)],
            dimension_numbers=("NCH", "OIH", "NCH"))
        return y + b[None, :, None]

    def leaky(x):
        return jnp.where(x >= 0, x, LEAKY_SLOPE * x)

    def bn(x):
        g = params["bn_gamma"][None, :, None]
        be = params["bn_beta"][None, :, None]
        m = params["bn_mean"][None, :, None]
        v = params["bn_var"][None, :, None]
        return (x - m) / jnp.sqrt(v + BN_EPS) * g + be

    h = x_ncw
    h = bn(leaky(conv1d(h, params["w1"], params["b1"])))
    h = bn(leaky(conv1d(h, params["w2"], params["b2"])))
    h = bn(leaky(conv1d(h, params["w3"], params["b3"])))
    flat = h.reshape(h.shape[0], -1)        # channel-major flatten, as nn.Flatten
    return flat @ params["fc_w"].T + params["fc_b"][None, :]


# --------------------------------- main --------------------------------------

if __name__ == "__main__":
    key = jax.random.PRNGKey(0)
    k_x, k_p = jax.random.split(key)

    B, L = 8, 16                      # input_shape = 16 -> fc_in = 16//8*128 = 256
    x = jax.random.normal(k_x, (B, 1, L), dtype=jnp.float32)
    params = init_params(k_p, input_shape=L, n_classes=1)
    ref = reference_forward(params, x)

    fwd = jax.jit(discriminator_forward)

    # f32 MXU operands: tight check against the pure-JAX reference.
    prep_f32 = prepare_params(params, compute_dtype=jnp.float32)
    out_f32 = jax.block_until_ready(fwd(prep_f32, x))
    np.testing.assert_allclose(np.asarray(out_f32), np.asarray(ref),
                               rtol=1e-3, atol=1e-3)

    # bf16 MXU operands (f32 accumulation, f32 elementwise): loose check.
    prep_bf16 = prepare_params(params, compute_dtype=jnp.bfloat16)
    out_bf16 = jax.block_until_ready(fwd(prep_bf16, x))
    np.testing.assert_allclose(np.asarray(out_bf16), np.asarray(ref),
                               rtol=1e-1, atol=1e-1)

    print("KERNEL_OK")
</pallas_src>

<mosaic_0001>
module attributes {stable_mosaic.version = 11 : i64} {
  func.func @fused_discriminator_kernel(%arg0: i32, %arg1: memref<1x2x8xf32, #tpu.memory_space<vmem>>, %arg2: memref<8x512xf32, #tpu.memory_space<vmem>>, %arg3: memref<8x512xf32, #tpu.memory_space<vmem>>, %arg4: memref<1x128xf32, #tpu.memory_space<vmem>>, %arg5: memref<3x128x128xf32, #tpu.memory_space<vmem>>, %arg6: memref<1x128xf32, #tpu.memory_space<vmem>>, %arg7: memref<3x128x128xf32, #tpu.memory_space<vmem>>, %arg8: memref<1x128xf32, #tpu.memory_space<vmem>>, %arg9: memref<1x128xf32, #tpu.memory_space<vmem>>, %arg10: memref<1x128xf32, #tpu.memory_space<vmem>>, %arg11: memref<1x2x128xf32, #tpu.memory_space<vmem>>, %arg12: memref<1x1xf32, #tpu.memory_space<vmem>>, %arg13: memref<1x1x1xf32, #tpu.memory_space<vmem>>) attributes {dimension_semantics = [#tpu.dimension_semantics<parallel>], iteration_bounds = array<i64: 8>, scalar_prefetch = 0 : i64, scratch_operands = 0 : i64, tpu.core_type = #tpu.core_type<tc>, window_params = [{transform_indices = @transform_0, window_bounds = array<i64: 1, 2, 8>}, {pipeline_mode = #tpu.pipeline_mode<synchronous>, transform_indices = @transform_1, window_bounds = array<i64: 8, 512>}, {pipeline_mode = #tpu.pipeline_mode<synchronous>, transform_indices = @transform_2, window_bounds = array<i64: 8, 512>}, {pipeline_mode = #tpu.pipeline_mode<synchronous>, transform_indices = @transform_3, window_bounds = array<i64: 1, 128>}, {pipeline_mode = #tpu.pipeline_mode<synchronous>, transform_indices = @transform_4, window_bounds = array<i64: 3, 128, 128>}, {pipeline_mode = #tpu.pipeline_mode<synchronous>, transform_indices = @transform_5, window_bounds = array<i64: 1, 128>}, {pipeline_mode = #tpu.pipeline_mode<synchronous>, transform_indices = @transform_6, window_bounds = array<i64: 3, 128, 128>}, {pipeline_mode = #tpu.pipeline_mode<synchronous>, transform_indices = @transform_7, window_bounds = array<i64: 1, 128>}, {pipeline_mode = #tpu.pipeline_mode<synchronous>, transform_indices = @transform_8, window_bounds = array<i64: 1, 128>}, {pipeline_mode = #tpu.pipeline_mode<synchronous>, transform_indices = @transform_9, window_bounds = array<i64: 1, 128>}, {pipeline_mode = #tpu.pipeline_mode<synchronous>, transform_indices = @transform_10, window_bounds = array<i64: 1, 2, 128>}, {pipeline_mode = #tpu.pipeline_mode<synchronous>, transform_indices = @transform_11, window_bounds = array<i64: 1, 1>}, {transform_indices = @transform_12, window_bounds = array<i64: 1, 1, 1>}]} {
    %c0 = arith.constant 0 : index
    %c0_0 = arith.constant 0 : index
    %0 = vector.load %arg9[%c0, %c0_0] : memref<1x128xf32, #tpu.memory_space<vmem>>, vector<1x128xf32>
    %c0_1 = arith.constant 0 : index
    %c0_2 = arith.constant 0 : index
    %1 = vector.load %arg10[%c0_1, %c0_2] : memref<1x128xf32, #tpu.memory_space<vmem>>, vector<1x128xf32>
    %c0_3 = arith.constant 0 : index
    %c0_4 = arith.constant 0 : index
    %c0_5 = arith.constant 0 : index
    %2 = vector.load %arg1[%c0_3, %c0_4, %c0_5] : memref<1x2x8xf32, #tpu.memory_space<vmem>>, vector<1x2x8xf32>
    %3 = vector.shape_cast %2 : vector<1x2x8xf32> to vector<2x8xf32>
    %cst = arith.constant 0.000000e+00 : f32
    %4 = vector.broadcast %cst : f32 to vector<1x8xf32>
    %5 = vector.extract_strided_slice %3 {offsets = [0, 0], sizes = [1, 8], strides = [1, 1]} : vector<2x8xf32> to vector<1x8xf32>
    %6 = tpu.concatenate %4, %5 in 0 : vector<1x8xf32>, vector<1x8xf32> -> vector<2x8xf32>
    %c0_6 = arith.constant 0 : index
    %c0_7 = arith.constant 0 : index
    %7 = vector.load %arg2[%c0_6, %c0_7] : memref<8x512xf32, #tpu.memory_space<vmem>>, vector<8x512xf32>
    %cst_8 = arith.constant dense<0.000000e+00> : vector<2x512xf32>
    %8 = tpu.matmul %3, %7, %cst_8 {dimension_numbers = #tpu.dot_dimension_numbers<[1], [0], [0], [1], [0, 0, 1, 1], [], []>} : vector<2x8xf32>, vector<8x512xf32>, vector<2x512xf32> -> vector<2x512xf32>
    %c0_9 = arith.constant 0 : index
    %c0_10 = arith.constant 0 : index
    %9 = vector.load %arg3[%c0_9, %c0_10] : memref<8x512xf32, #tpu.memory_space<vmem>>, vector<8x512xf32>
    %cst_11 = arith.constant dense<0.000000e+00> : vector<2x512xf32>
    %10 = tpu.matmul %6, %9, %cst_11 {dimension_numbers = #tpu.dot_dimension_numbers<[1], [0], [0], [1], [0, 0, 1, 1], [], []>} : vector<2x8xf32>, vector<8x512xf32>, vector<2x512xf32> -> vector<2x512xf32>
    %11 = arith.addf %8, %10 : vector<2x512xf32>
    %c0_12 = arith.constant 0 : index
    %c0_13 = arith.constant 0 : index
    %12 = vector.load %arg4[%c0_12, %c0_13] : memref<1x128xf32, #tpu.memory_space<vmem>>, vector<1x128xf32>
    %13 = vector.extract_strided_slice %11 {offsets = [0, 0], sizes = [2, 128], strides = [1, 1]} : vector<2x512xf32> to vector<2x128xf32>
    %14 = vector.broadcast %12 : vector<1x128xf32> to vector<2x128xf32>
    %15 = arith.addf %13, %14 : vector<2x128xf32>
    %cst_14 = arith.constant 0.000000e+00 : f32
    %16 = vector.broadcast %cst_14 : f32 to vector<2x128xf32>
    %17 = arith.cmpf oge, %15, %16 : vector<2x128xf32>
    %cst_15 = arith.constant 2.000000e-01 : f32
    %18 = vector.broadcast %cst_15 : f32 to vector<2x128xf32>
    %19 = arith.mulf %18, %15 : vector<2x128xf32>
    %20 = arith.select %17, %15, %19 : vector<2x128xi1>, vector<2x128xf32>
    %21 = vector.broadcast %0 : vector<1x128xf32> to vector<2x128xf32>
    %22 = arith.mulf %20, %21 : vector<2x128xf32>
    %23 = vector.broadcast %1 : vector<1x128xf32> to vector<2x128xf32>
    %24 = arith.addf %22, %23 : vector<2x128xf32>
    %25 = vector.extract_strided_slice %11 {offsets = [0, 128], sizes = [2, 128], strides = [1, 1]} : vector<2x512xf32> to vector<2x128xf32>
    %26 = vector.broadcast %12 : vector<1x128xf32> to vector<2x128xf32>
    %27 = arith.addf %25, %26 : vector<2x128xf32>
    %cst_16 = arith.constant 0.000000e+00 : f32
    %28 = vector.broadcast %cst_16 : f32 to vector<2x128xf32>
    %29 = arith.cmpf oge, %27, %28 : vector<2x128xf32>
    %cst_17 = arith.constant 2.000000e-01 : f32
    %30 = vector.broadcast %cst_17 : f32 to vector<2x128xf32>
    %31 = arith.mulf %30, %27 : vector<2x128xf32>
    %32 = arith.select %29, %27, %31 : vector<2x128xi1>, vector<2x128xf32>
    %33 = vector.broadcast %0 : vector<1x128xf32> to vector<2x128xf32>
    %34 = arith.mulf %32, %33 : vector<2x128xf32>
    %35 = vector.broadcast %1 : vector<1x128xf32> to vector<2x128xf32>
    %36 = arith.addf %34, %35 : vector<2x128xf32>
    %37 = vector.extract_strided_slice %11 {offsets = [0, 256], sizes = [2, 128], strides = [1, 1]} : vector<2x512xf32> to vector<2x128xf32>
    %38 = vector.broadcast %12 : vector<1x128xf32> to vector<2x128xf32>
    %39 = arith.addf %37, %38 : vector<2x128xf32>
    %cst_18 = arith.constant 0.000000e+00 : f32
    %40 = vector.broadcast %cst_18 : f32 to vector<2x128xf32>
    %41 = arith.cmpf oge, %39, %40 : vector<2x128xf32>
    %cst_19 = arith.constant 2.000000e-01 : f32
    %42 = vector.broadcast %cst_19 : f32 to vector<2x128xf32>
    %43 = arith.mulf %42, %39 : vector<2x128xf32>
    %44 = arith.select %41, %39, %43 : vector<2x128xi1>, vector<2x128xf32>
    %45 = vector.broadcast %0 : vector<1x128xf32> to vector<2x128xf32>
    %46 = arith.mulf %44, %45 : vector<2x128xf32>
    %47 = vector.broadcast %1 : vector<1x128xf32> to vector<2x128xf32>
    %48 = arith.addf %46, %47 : vector<2x128xf32>
    %49 = vector.extract_strided_slice %11 {offsets = [0, 384], sizes = [2, 128], strides = [1, 1]} : vector<2x512xf32> to vector<2x128xf32>
    %50 = vector.broadcast %12 : vector<1x128xf32> to vector<2x128xf32>
    %51 = arith.addf %49, %50 : vector<2x128xf32>
    %cst_20 = arith.constant 0.000000e+00 : f32
    %52 = vector.broadcast %cst_20 : f32 to vector<2x128xf32>
    %53 = arith.cmpf oge, %51, %52 : vector<2x128xf32>
    %cst_21 = arith.constant 2.000000e-01 : f32
    %54 = vector.broadcast %cst_21 : f32 to vector<2x128xf32>
    %55 = arith.mulf %54, %51 : vector<2x128xf32>
    %56 = arith.select %53, %51, %55 : vector<2x128xi1>, vector<2x128xf32>
    %57 = vector.broadcast %0 : vector<1x128xf32> to vector<2x128xf32>
    %58 = arith.mulf %56, %57 : vector<2x128xf32>
    %59 = vector.broadcast %1 : vector<1x128xf32> to vector<2x128xf32>
    %60 = arith.addf %58, %59 : vector<2x128xf32>
    %c0_22 = arith.constant 0 : index
    %c0_23 = arith.constant 0 : index
    %61 = vector.load %arg6[%c0_22, %c0_23] : memref<1x128xf32, #tpu.memory_space<vmem>>, vector<1x128xf32>
    %cst_24 = arith.constant 0.000000e+00 : f32
    %62 = vector.broadcast %cst_24 : f32 to vector<1x128xf32>
    %63 = vector.extract_strided_slice %60 {offsets = [0, 0], sizes = [1, 128], strides = [1, 1]} : vector<2x128xf32> to vector<1x128xf32>
    %64 = tpu.concatenate %62, %63 in 0 : vector<1x128xf32>, vector<1x128xf32> -> vector<2x128xf32>
    %c0_25 = arith.constant 0 : index
    %c0_26 = arith.constant 0 : index
    %c0_27 = arith.constant 0 : index
    %65 = vector.load %arg5[%c0_25, %c0_26, %c0_27] : memref<3x128x128xf32, #tpu.memory_space<vmem>>, vector<1x128x128xf32>
    %66 = vector.shape_cast %65 : vector<1x128x128xf32> to vector<128x128xf32>
    %cst_28 = arith.constant dense<0.000000e+00> : vector<2x128xf32>
    %67 = tpu.matmul %64, %66, %cst_28 {dimension_numbers = #tpu.dot_dimension_numbers<[1], [0], [0], [1], [0, 0, 1, 1], [], []>} : vector<2x128xf32>, vector<128x128xf32>, vector<2x128xf32> -> vector<2x128xf32>
    %c1 = arith.constant 1 : index
    %c0_29 = arith.constant 0 : index
    %c0_30 = arith.constant 0 : index
    %68 = vector.load %arg5[%c1, %c0_29, %c0_30] : memref<3x128x128xf32, #tpu.memory_space<vmem>>, vector<1x128x128xf32>
    %69 = vector.shape_cast %68 : vector<1x128x128xf32> to vector<128x128xf32>
    %cst_31 = arith.constant dense<0.000000e+00> : vector<2x128xf32>
    %70 = tpu.matmul %24, %69, %cst_31 {dimension_numbers = #tpu.dot_dimension_numbers<[1], [0], [0], [1], [0, 0, 1, 1], [], []>} : vector<2x128xf32>, vector<128x128xf32>, vector<2x128xf32> -> vector<2x128xf32>
    %71 = arith.addf %67, %70 : vector<2x128xf32>
    %c2 = arith.constant 2 : index
    %c0_32 = arith.constant 0 : index
    %c0_33 = arith.constant 0 : index
    %72 = vector.load %arg5[%c2, %c0_32, %c0_33] : memref<3x128x128xf32, #tpu.memory_space<vmem>>, vector<1x128x128xf32>
    %73 = vector.shape_cast %72 : vector<1x128x128xf32> to vector<128x128xf32>
    %cst_34 = arith.constant dense<0.000000e+00> : vector<2x128xf32>
    %74 = tpu.matmul %36, %73, %cst_34 {dimension_numbers = #tpu.dot_dimension_numbers<[1], [0], [0], [1], [0, 0, 1, 1], [], []>} : vector<2x128xf32>, vector<128x128xf32>, vector<2x128xf32> -> vector<2x128xf32>
    %75 = arith.addf %71, %74 : vector<2x128xf32>
    %76 = vector.broadcast %61 : vector<1x128xf32> to vector<2x128xf32>
    %77 = arith.addf %75, %76 : vector<2x128xf32>
    %cst_35 = arith.constant 0.000000e+00 : f32
    %78 = vector.broadcast %cst_35 : f32 to vector<2x128xf32>
    %79 = arith.cmpf oge, %77, %78 : vector<2x128xf32>
    %cst_36 = arith.constant 2.000000e-01 : f32
    %80 = vector.broadcast %cst_36 : f32 to vector<2x128xf32>
    %81 = arith.mulf %80, %77 : vector<2x128xf32>
    %82 = arith.select %79, %77, %81 : vector<2x128xi1>, vector<2x128xf32>
    %83 = vector.broadcast %0 : vector<1x128xf32> to vector<2x128xf32>
    %84 = arith.mulf %82, %83 : vector<2x128xf32>
    %85 = vector.broadcast %1 : vector<1x128xf32> to vector<2x128xf32>
    %86 = arith.addf %84, %85 : vector<2x128xf32>
    %c0_37 = arith.constant 0 : index
    %c0_38 = arith.constant 0 : index
    %c0_39 = arith.constant 0 : index
    %87 = vector.load %arg5[%c0_37, %c0_38, %c0_39] : memref<3x128x128xf32, #tpu.memory_space<vmem>>, vector<1x128x128xf32>
    %88 = vector.shape_cast %87 : vector<1x128x128xf32> to vector<128x128xf32>
    %cst_40 = arith.constant dense<0.000000e+00> : vector<2x128xf32>
    %89 = tpu.matmul %36, %88, %cst_40 {dimension_numbers = #tpu.dot_dimension_numbers<[1], [0], [0], [1], [0, 0, 1, 1], [], []>} : vector<2x128xf32>, vector<128x128xf32>, vector<2x128xf32> -> vector<2x128xf32>
    %c1_41 = arith.constant 1 : index
    %c0_42 = arith.constant 0 : index
    %c0_43 = arith.constant 0 : index
    %90 = vector.load %arg5[%c1_41, %c0_42, %c0_43] : memref<3x128x128xf32, #tpu.memory_space<vmem>>, vector<1x128x128xf32>
    %91 = vector.shape_cast %90 : vector<1x128x128xf32> to vector<128x128xf32>
    %cst_44 = arith.constant dense<0.000000e+00> : vector<2x128xf32>
    %92 = tpu.matmul %48, %91, %cst_44 {dimension_numbers = #tpu.dot_dimension_numbers<[1], [0], [0], [1], [0, 0, 1, 1], [], []>} : vector<2x128xf32>, vector<128x128xf32>, vector<2x128xf32> -> vector<2x128xf32>
    %93 = arith.addf %89, %92 : vector<2x128xf32>
    %c2_45 = arith.constant 2 : index
    %c0_46 = arith.constant 0 : index
    %c0_47 = arith.constant 0 : index
    %94 = vector.load %arg5[%c2_45, %c0_46, %c0_47] : memref<3x128x128xf32, #tpu.memory_space<vmem>>, vector<1x128x128xf32>
    %95 = vector.shape_cast %94 : vector<1x128x128xf32> to vector<128x128xf32>
    %cst_48 = arith.constant dense<0.000000e+00> : vector<2x128xf32>
    %96 = tpu.matmul %60, %95, %cst_48 {dimension_numbers = #tpu.dot_dimension_numbers<[1], [0], [0], [1], [0, 0, 1, 1], [], []>} : vector<2x128xf32>, vector<128x128xf32>, vector<2x128xf32> -> vector<2x128xf32>
    %97 = arith.addf %93, %96 : vector<2x128xf32>
    %98 = vector.broadcast %61 : vector<1x128xf32> to vector<2x128xf32>
    %99 = arith.addf %97, %98 : vector<2x128xf32>
    %cst_49 = arith.constant 0.000000e+00 : f32
    %100 = vector.broadcast %cst_49 : f32 to vector<2x128xf32>
    %101 = arith.cmpf oge, %99, %100 : vector<2x128xf32>
    %cst_50 = arith.constant 2.000000e-01 : f32
    %102 = vector.broadcast %cst_50 : f32 to vector<2x128xf32>
    %103 = arith.mulf %102, %99 : vector<2x128xf32>
    %104 = arith.select %101, %99, %103 : vector<2x128xi1>, vector<2x128xf32>
    %105 = vector.broadcast %0 : vector<1x128xf32> to vector<2x128xf32>
    %106 = arith.mulf %104, %105 : vector<2x128xf32>
    %107 = vector.broadcast %1 : vector<1x128xf32> to vector<2x128xf32>
    %108 = arith.addf %106, %107 : vector<2x128xf32>
    %cst_51 = arith.constant 0.000000e+00 : f32
    %109 = vector.broadcast %cst_51 : f32 to vector<1x128xf32>
    %110 = vector.extract_strided_slice %108 {offsets = [0, 0], sizes = [1, 128], strides = [1, 1]} : vector<2x128xf32> to vector<1x128xf32>
    %111 = tpu.concatenate %109, %110 in 0 : vector<1x128xf32>, vector<1x128xf32> -> vector<2x128xf32>
    %c0_52 = arith.constant 0 : index
    %c0_53 = arith.constant 0 : index
    %c0_54 = arith.constant 0 : index
    %112 = vector.load %arg7[%c0_52, %c0_53, %c0_54] : memref<3x128x128xf32, #tpu.memory_space<vmem>>, vector<1x128x128xf32>
    %113 = vector.shape_cast %112 : vector<1x128x128xf32> to vector<128x128xf32>
    %cst_55 = arith.constant dense<0.000000e+00> : vector<2x128xf32>
    %114 = tpu.matmul %111, %113, %cst_55 {dimension_numbers = #tpu.dot_dimension_numbers<[1], [0], [0], [1], [0, 0, 1, 1], [], []>} : vector<2x128xf32>, vector<128x128xf32>, vector<2x128xf32> -> vector<2x128xf32>
    %c1_56 = arith.constant 1 : index
    %c0_57 = arith.constant 0 : index
    %c0_58 = arith.constant 0 : index
    %115 = vector.load %arg7[%c1_56, %c0_57, %c0_58] : memref<3x128x128xf32, #tpu.memory_space<vmem>>, vector<1x128x128xf32>
    %116 = vector.shape_cast %115 : vector<1x128x128xf32> to vector<128x128xf32>
    %cst_59 = arith.constant dense<0.000000e+00> : vector<2x128xf32>
    %117 = tpu.matmul %86, %116, %cst_59 {dimension_numbers = #tpu.dot_dimension_numbers<[1], [0], [0], [1], [0, 0, 1, 1], [], []>} : vector<2x128xf32>, vector<128x128xf32>, vector<2x128xf32> -> vector<2x128xf32>
    %118 = arith.addf %114, %117 : vector<2x128xf32>
    %c2_60 = arith.constant 2 : index
    %c0_61 = arith.constant 0 : index
    %c0_62 = arith.constant 0 : index
    %119 = vector.load %arg7[%c2_60, %c0_61, %c0_62] : memref<3x128x128xf32, #tpu.memory_space<vmem>>, vector<1x128x128xf32>
    %120 = vector.shape_cast %119 : vector<1x128x128xf32> to vector<128x128xf32>
    %cst_63 = arith.constant dense<0.000000e+00> : vector<2x128xf32>
    %121 = tpu.matmul %108, %120, %cst_63 {dimension_numbers = #tpu.dot_dimension_numbers<[1], [0], [0], [1], [0, 0, 1, 1], [], []>} : vector<2x128xf32>, vector<128x128xf32>, vector<2x128xf32> -> vector<2x128xf32>
    %122 = arith.addf %118, %121 : vector<2x128xf32>
    %c0_64 = arith.constant 0 : index
    %c0_65 = arith.constant 0 : index
    %123 = vector.load %arg8[%c0_64, %c0_65] : memref<1x128xf32, #tpu.memory_space<vmem>>, vector<1x128xf32>
    %124 = vector.broadcast %123 : vector<1x128xf32> to vector<2x128xf32>
    %125 = arith.addf %122, %124 : vector<2x128xf32>
    %cst_66 = arith.constant 0.000000e+00 : f32
    %126 = vector.broadcast %cst_66 : f32 to vector<2x128xf32>
    %127 = arith.cmpf oge, %125, %126 : vector<2x128xf32>
    %cst_67 = arith.constant 2.000000e-01 : f32
    %128 = vector.broadcast %cst_67 : f32 to vector<2x128xf32>
    %129 = arith.mulf %128, %125 : vector<2x128xf32>
    %130 = arith.select %127, %125, %129 : vector<2x128xi1>, vector<2x128xf32>
    %131 = vector.broadcast %0 : vector<1x128xf32> to vector<2x128xf32>
    %132 = arith.mulf %130, %131 : vector<2x128xf32>
    %133 = vector.broadcast %1 : vector<1x128xf32> to vector<2x128xf32>
    %134 = arith.addf %132, %133 : vector<2x128xf32>
    %c0_68 = arith.constant 0 : index
    %c0_69 = arith.constant 0 : index
    %c0_70 = arith.constant 0 : index
    %135 = vector.load %arg11[%c0_68, %c0_69, %c0_70] : memref<1x2x128xf32, #tpu.memory_space<vmem>>, vector<1x2x128xf32>
    %c0_71 = arith.constant 0 : index
    %c0_72 = arith.constant 0 : index
    %136 = vector.load %arg12[%c0_71, %c0_72] : memref<1x1xf32, #tpu.memory_space<vmem>>, vector<1x1xf32>
    %cst_73 = arith.constant 0.000000e+00 : f32
    %137 = vector.broadcast %cst_73 : f32 to vector<1x1xf32>
    %138 = tpu.iota {dimensions = array<i32: 1>} : vector<1x1xi32>
    %139 = vector.shape_cast %135 : vector<1x2x128xf32> to vector<2x128xf32>
    %140 = arith.mulf %134, %139 : vector<2x128xf32>
    %141 = vector.shape_cast %140 : vector<2x128xf32> to vector<1x2x128xf32>
    %cst_74 = arith.constant dense<0.000000e+00> : vector<1xf32>
    %142 = vector.multi_reduction <add>, %141, %cst_74 [1, 2] : vector<1x2x128xf32> to vector<1xf32>
    %143 = vector.shape_cast %142 : vector<1xf32> to vector<1x1x1xf32>
    %144 = vector.extract %143[0, 0, 0] : f32 from vector<1x1x1xf32>
    %c0_i32 = arith.constant 0 : i32
    %145 = vector.broadcast %c0_i32 : i32 to vector<1x1xi32>
    %146 = arith.cmpi eq, %138, %145 : vector<1x1xi32>
    %cst_75 = arith.constant 0.000000e+00 : f32
    %147 = vector.broadcast %144 : f32 to vector<1x1xf32>
    %148 = vector.broadcast %cst_75 : f32 to vector<1x1xf32>
    %149 = arith.select %146, %147, %148 : vector<1x1xi1>, vector<1x1xf32>
    %150 = arith.addf %137, %149 : vector<1x1xf32>
    %151 = arith.addf %150, %136 : vector<1x1xf32>
    %152 = vector.shape_cast %151 : vector<1x1xf32> to vector<1x1x1xf32>
    %c0_76 = arith.constant 0 : index
    %c0_77 = arith.constant 0 : index
    %c0_78 = arith.constant 0 : index
    %153 = vector.load %arg13[%c0_76, %c0_77, %c0_78] : memref<1x1x1xf32, #tpu.memory_space<vmem>>, vector<1x1x1xf32>
    tpu.vector_store %arg13[%c0_76, %c0_77, %c0_78], %152 {strides = array<i32>} : memref<1x1x1xf32, #tpu.memory_space<vmem>>, vector<1x1x1xf32>,
    return
  }
  func.func @transform_0(%arg0: i32) -> (i32, i32, i32) {
    %c0_i32 = arith.constant 0 : i32
    %c0_i32_0 = arith.constant 0 : i32
    %c0_i32_1 = arith.constant 0 : i32
    return %arg0, %c0_i32, %c0_i32_0 : i32, i32, i32
  }
  func.func @transform_1(%arg0: i32) -> (i32, i32) {
    %c0_i32 = arith.constant 0 : i32
    %c0_i32_0 = arith.constant 0 : i32
    %c0_i32_1 = arith.constant 0 : i32
    return %c0_i32, %c0_i32_0 : i32, i32
  }
  func.func @transform_2(%arg0: i32) -> (i32, i32) {
    %c0_i32 = arith.constant 0 : i32
    %c0_i32_0 = arith.constant 0 : i32
    %c0_i32_1 = arith.constant 0 : i32
    return %c0_i32, %c0_i32_0 : i32, i32
  }
  func.func @transform_3(%arg0: i32) -> (i32, i32) {
    %c0_i32 = arith.constant 0 : i32
    %c0_i32_0 = arith.constant 0 : i32
    %c0_i32_1 = arith.constant 0 : i32
    return %c0_i32, %c0_i32_0 : i32, i32
  }
  func.func @transform_4(%arg0: i32) -> (i32, i32, i32) {
    %c0_i32 = arith.constant 0 : i32
    %c0_i32_0 = arith.constant 0 : i32
    %c0_i32_1 = arith.constant 0 : i32
    %c0_i32_2 = arith.constant 0 : i32
    return %c0_i32, %c0_i32_0, %c0_i32_1 : i32, i32, i32
  }
  func.func @transform_5(%arg0: i32) -> (i32, i32) {
    %c0_i32 = arith.constant 0 : i32
    %c0_i32_0 = arith.constant 0 : i32
    %c0_i32_1 = arith.constant 0 : i32
    return %c0_i32, %c0_i32_0 : i32, i32
  }
  func.func @transform_6(%arg0: i32) -> (i32, i32, i32) {
    %c0_i32 = arith.constant 0 : i32
    %c0_i32_0 = arith.constant 0 : i32
    %c0_i32_1 = arith.constant 0 : i32
    %c0_i32_2 = arith.constant 0 : i32
    return %c0_i32, %c0_i32_0, %c0_i32_1 : i32, i32, i32
  }
  func.func @transform_7(%arg0: i32) -> (i32, i32) {
    %c0_i32 = arith.constant 0 : i32
    %c0_i32_0 = arith.constant 0 : i32
    %c0_i32_1 = arith.constant 0 : i32
    return %c0_i32, %c0_i32_0 : i32, i32
  }
  func.func @transform_8(%arg0: i32) -> (i32, i32) {
    %c0_i32 = arith.constant 0 : i32
    %c0_i32_0 = arith.constant 0 : i32
    %c0_i32_1 = arith.constant 0 : i32
    return %c0_i32, %c0_i32_0 : i32, i32
  }
  func.func @transform_9(%arg0: i32) -> (i32, i32) {
    %c0_i32 = arith.constant 0 : i32
    %c0_i32_0 = arith.constant 0 : i32
    %c0_i32_1 = arith.constant 0 : i32
    return %c0_i32, %c0_i32_0 : i32, i32
  }
  func.func @transform_10(%arg0: i32) -> (i32, i32, i32) {
    %c0_i32 = arith.constant 0 : i32
    %c0_i32_0 = arith.constant 0 : i32
    %c0_i32_1 = arith.constant 0 : i32
    %c0_i32_2 = arith.constant 0 : i32
    return %c0_i32, %c0_i32_0, %c0_i32_1 : i32, i32, i32
  }
  func.func @transform_11(%arg0: i32) -> (i32, i32) {
    %c0_i32 = arith.constant 0 : i32
    %c0_i32_0 = arith.constant 0 : i32
    %c0_i32_1 = arith.constant 0 : i32
    return %c0_i32, %c0_i32_0 : i32, i32
  }
  func.func @transform_12(%arg0: i32) -> (i32, i32, i32) {
    %c0_i32 = arith.constant 0 : i32
    %c0_i32_0 = arith.constant 0 : i32
    %c0_i32_1 = arith.constant 0 : i32
    return %arg0, %c0_i32, %c0_i32_0 : i32, i32, i32
  }
}

</mosaic_0001>

<llo_original>
// kernel: discriminator_forward.1
$region0: #{discriminator_forward.1}
  #allocation0 [shape = 'u32[]', space=smem, size = 0x4, offset = 0x4, fixed_abs, tag = 'smem constant byte address 0x4 - core index']
  #allocation1 [shape = 'u32[144,128]{1,0:T(1,128)}', space=vmem, size = 0x12000, scoped, tag = 'internal scratch']
  #allocation2 [shape = 'f32[1,1]{1,0:T(1,128)S(1)}', space=vmem, size = 0x200, scoped, tag = 'scoped memory for discriminator_forward.1']
  %s0 = inlined_call_operand.vmem [shape: f32[8,2,8], index: 0, kind: input, shape index: {}]
  %s1 = inlined_call_operand.vmem [shape: f32[8,512], index: 1, kind: input, shape index: {}]
  %s2 = inlined_call_operand.vmem [shape: f32[8,512], index: 2, kind: input, shape index: {}]
  %s3 = inlined_call_operand.vmem [shape: f32[1,128], index: 3, kind: input, shape index: {}]
  %s4 = inlined_call_operand.hbm [shape: f32[3,128,128], index: 4, kind: input, shape index: {}]
  %s5 = inlined_call_operand.hbm [shape: f32[1,128], index: 5, kind: input, shape index: {}]
  %s6 = inlined_call_operand.hbm [shape: f32[3,128,128], index: 6, kind: input, shape index: {}]
  %s7 = inlined_call_operand.hbm [shape: f32[1,128], index: 7, kind: input, shape index: {}]
  %s8 = inlined_call_operand.hbm [shape: f32[1,128], index: 8, kind: input, shape index: {}]
  %s9 = inlined_call_operand.hbm [shape: f32[1,128], index: 9, kind: input, shape index: {}]
  %s10 = inlined_call_operand.vmem [shape: f32[1,2,128], index: 10, kind: input, shape index: {}]
  %s11 = inlined_call_operand.<no memory space> [shape: f32[1,1], index: 11, kind: input, shape index: {}]
  %s12 = inlined_call_operand.vmem [shape: f32[8,1,1], index: 12, kind: output, shape index: {}]
  %s13 = sld [smem:[#allocation0]]
  $region105: #{discriminator_forward.1} parent=0
    _
  %s15 = ssub.s32 1, %s13
  %s16 = scalar_select 0, %s15, %s13
  %v17 = vstv %s11
  %18 = vst [vmem:[#allocation2] sm:$0x1] %v17
  $region1: #{discriminator_forward.1} parent=0
    #allocation3 [shape = 'u8[196608]{0}', space=vmem, size = 0x30000, scoped, tag = 'input window, operand 4, single buffered']
    #allocation4 [shape = 's32[2]{0}', space=sflag, size = 0x8, scoped, tag = 'scoped memory for discriminator_forward.1']
    #allocation5 [shape = 'u8[512]{0}', space=vmem, size = 0x400, scoped, tag = 'input window, operand 5, single buffered']
    #allocation6 [shape = 's32[1]{0}', space=sflag, size = 0x4, scoped, tag = 'scoped memory for discriminator_forward.1']
    #allocation7 [shape = 'u8[196608]{0}', space=vmem, size = 0x30000, scoped, tag = 'input window, operand 6, single buffered']
    #allocation8 [shape = 'u8[512]{0}', space=vmem, size = 0x400, scoped, tag = 'input window, operand 7, single buffered']
    #allocation9 [shape = 's32[1]{0}', space=sflag, size = 0x4, scoped, tag = 'scoped memory for discriminator_forward.1']
    #allocation10 [shape = 'u8[512]{0}', space=vmem, size = 0x400, scoped, tag = 'input window, operand 8, single buffered']
    #allocation11 [shape = 'u8[512]{0}', space=vmem, size = 0x400, scoped, tag = 'input window, operand 9, single buffered']
    #allocation12 [shape = 's32[1]{0}', space=sflag, size = 0x4, scoped, tag = 'scoped memory for discriminator_forward.1']
    %19 = vsyncpa [#allocation4], 0
    %20 = vsyncpa [#allocation6], 0
    %21 = vsyncpa [#allocation9], 0
    %22 = vsyncpa [#allocation12], 0
    loop: start=0, step=1, limit=10
    $region2: #{discriminator_forward.1} parent=1 // loop_pre_header
      _
    $region3: #{discriminator_forward.1} parent=1 // loop_header
      %s24 = sphi 0, %s28
      %p25 = scmp.ge.s32.totalorder %s24, 10
      %s34 = sphi 0, %s36
      %s37 = sphi 0, %s34
      %s38 = sphi 0, %s37
      %s54 = sphi 0, %s38
      %s58 = sphi 0, %s58
      %s60 = sphi 0, %s58
      %s61 = sphi 0, %s60
      %s75 = sphi 0, %s61
      %s79 = sphi 0, %s79
      %s81 = sphi 0, %s79
      %s82 = sphi 0, %s81
      %s96 = sphi 0, %s82
      %s100 = sphi 0, %s100
      %s102 = sphi 0, %s100
      %s103 = sphi 0, %s102
      %s117 = sphi 0, %s103
      %s121 = sphi 0, %s121
      %s123 = sphi 0, %s121
      %s124 = sphi 0, %s123
      %s138 = sphi 0, %s124
      %s142 = sphi 0, %s142
      %s144 = sphi 0, %s142
      %s145 = sphi 0, %s144
      %s159 = sphi 0, %s145
      %s163 = sphi 0, %s163
      %s165 = sphi 0, %s163
      %s166 = sphi 0, %s165
      %s180 = sphi 0, %s166
      %s184 = sphi 0, %s184
      %s186 = sphi 0, %s184
      %s187 = sphi 0, %s186
      %s201 = sphi 0, %s187
      %s205 = sphi 0, %s205
      %s207 = sphi 0, %s205
      %s208 = sphi 0, %s207
      %s222 = sphi 0, %s208
      %s226 = sphi 0, %s226
      %s228 = sphi 0, %s226
      %s229 = sphi 0, %s228
      %s243 = sphi 0, %s229
      %s247 = sphi 0, %s247
      %s249 = sphi 0, %s247
      %s250 = sphi 0, %s249
      %s264 = sphi 0, %s250
      %s268 = sphi 0, %s268
      %s270 = sphi 0, %s268
      %s271 = sphi 0, %s270
      %s285 = sphi 0, %s271
      %s291 = sphi 0, %s293
      %s294 = sphi 0, %s291
      %s295 = sphi 0, %s294
      %s311 = sphi 0, %s295
    $region4: #{discriminator_forward.1} parent=1 // loop_header_branch
      %27 = sbr.rel (%p25) target = $region8
    $region5: #{discriminator_forward.1} parent=1 // loop_body
      %s29 = ssub.s32 %s24, 1
      %s30 = ssub.s32 %s24, 2
      %s31 = sadd.s32 %s24, 1
      %s32 = ssub.s32 %s24, %s31
      %p33 = scmp.eq.s32.totalorder %s32, 0
      %s35 = sadd.s32 %s34, 1
      %s36 = scalar_select %p33, %s34, %s35
      %p39 = pneg %p33
      %p40 = scmp.eq.s32.totalorder %s24, 7
      %p41 = por %p39, %p40
      %p42 = scmp.ne.s32.totalorder %s34, %s37
      %p43 = scmp.eq.s32.totalorder %s24, 0
      %p44 = por %p42, %p43
      %p45 = scmp.ne.s32.totalorder %s34, %s37
      %p46 = scmp.eq.s32.totalorder %s29, 7
      %p47 = por %p45, %p46
      %p48 = scmp.ne.s32.totalorder %s37, %s38
      %p49 = scmp.eq.s32.totalorder %s29, 0
      %p50 = por %p48, %p49
      %p51 = scmp.ne.s32.totalorder %s37, %s38
      %p52 = scmp.eq.s32.totalorder %s30, 7
      %p53 = por %p51, %p52
      %p55 = scmp.ne.s32.totalorder %s38, %s54
      %p56 = scmp.eq.s32.totalorder %s30, 0
      %p57 = por %p55, %p56
      %s59 = sadd.s32 %s58, 1
      %p62 = scmp.eq.s32.totalorder %s24, 7
      %p63 = scmp.ne.s32.totalorder %s58, %s60
      %p64 = scmp.eq.s32.totalorder %s24, 0
      %p65 = por %p63, %p64
      %p66 = scmp.ne.s32.totalorder %s58, %s60
      %p67 = scmp.eq.s32.totalorder %s29, 7
      %p68 = por %p66, %p67
      %p69 = scmp.ne.s32.totalorder %s60, %s61
      %p70 = scmp.eq.s32.totalorder %s29, 0
      %p71 = por %p69, %p70
      %p72 = scmp.ne.s32.totalorder %s60, %s61
      %p73 = scmp.eq.s32.totalorder %s30, 7
      %p74 = por %p72, %p73
      %p76 = scmp.ne.s32.totalorder %s61, %s75
      %p77 = scmp.eq.s32.totalorder %s30, 0
      %p78 = por %p76, %p77
      %s80 = sadd.s32 %s79, 1
      %p83 = scmp.eq.s32.totalorder %s24, 7
      %p84 = scmp.ne.s32.totalorder %s79, %s81
      %p85 = scmp.eq.s32.totalorder %s24, 0
      %p86 = por %p84, %p85
      %p87 = scmp.ne.s32.totalorder %s79, %s81
      %p88 = scmp.eq.s32.totalorder %s29, 7
      %p89 = por %p87, %p88
      %p90 = scmp.ne.s32.totalorder %s81, %s82
      %p91 = scmp.eq.s32.totalorder %s29, 0
      %p92 = por %p90, %p91
      %p93 = scmp.ne.s32.totalorder %s81, %s82
      %p94 = scmp.eq.s32.totalorder %s30, 7
      %p95 = por %p93, %p94
      %p97 = scmp.ne.s32.totalorder %s82, %s96
      %p98 = scmp.eq.s32.totalorder %s30, 0
      %p99 = por %p97, %p98
      %s101 = sadd.s32 %s100, 1
      %p104 = scmp.eq.s32.totalorder %s24, 7
      %p105 = scmp.ne.s32.totalorder %s100, %s102
      %p106 = scmp.eq.s32.totalorder %s24, 0
      %p107 = por %p105, %p106
      %p108 = scmp.ne.s32.totalorder %s100, %s102
      %p109 = scmp.eq.s32.totalorder %s29, 7
      %p110 = por %p108, %p109
      %p111 = scmp.ne.s32.totalorder %s102, %s103
      %p112 = scmp.eq.s32.totalorder %s29, 0
      %p113 = por %p111, %p112
      %p114 = scmp.ne.s32.totalorder %s102, %s103
      %p115 = scmp.eq.s32.totalorder %s30, 7
      %p116 = por %p114, %p115
      %p118 = scmp.ne.s32.totalorder %s103, %s117
      %p119 = scmp.eq.s32.totalorder %s30, 0
      %p120 = por %p118, %p119
      %s122 = sadd.s32 %s121, 1
      %p125 = scmp.eq.s32.totalorder %s24, 7
      %p126 = scmp.ne.s32.totalorder %s121, %s123
      %p127 = scmp.eq.s32.totalorder %s24, 0
      %p128 = por %p126, %p127
      %p129 = scmp.ne.s32.totalorder %s121, %s123
      %p130 = scmp.eq.s32.totalorder %s29, 7
      %p131 = por %p129, %p130
      %p132 = scmp.ne.s32.totalorder %s123, %s124
      %p133 = scmp.eq.s32.totalorder %s29, 0
      %p134 = por %p132, %p133
      %p135 = scmp.ne.s32.totalorder %s123, %s124
      %p136 = scmp.eq.s32.totalorder %s30, 7
      %p137 = por %p135, %p136
      %p139 = scmp.ne.s32.totalorder %s124, %s138
      %p140 = scmp.eq.s32.totalorder %s30, 0
      %p141 = por %p139, %p140
      %s143 = sadd.s32 %s142, 1
      %p146 = scmp.eq.s32.totalorder %s24, 7
      %p147 = scmp.ne.s32.totalorder %s142, %s144
      %p148 = scmp.eq.s32.totalorder %s24, 0
      %p149 = por %p147, %p148
      %p150 = scmp.ne.s32.totalorder %s142, %s144
      %p151 = scmp.eq.s32.totalorder %s29, 7
      %p152 = por %p150, %p151
      %p153 = scmp.ne.s32.totalorder %s144, %s145
      %p154 = scmp.eq.s32.totalorder %s29, 0
      %p155 = por %p153, %p154
      %p156 = scmp.ne.s32.totalorder %s144, %s145
      %p157 = scmp.eq.s32.totalorder %s30, 7
      %p158 = por %p156, %p157
      %p160 = scmp.ne.s32.totalorder %s145, %s159
      %p161 = scmp.eq.s32.totalorder %s30, 0
      %p162 = por %p160, %p161
      %s164 = sadd.s32 %s163, 1
      %p167 = scmp.eq.s32.totalorder %s24, 7
      %p168 = scmp.ne.s32.totalorder %s163, %s165
      %p169 = scmp.eq.s32.totalorder %s24, 0
      %p170 = por %p168, %p169
      %p171 = scmp.ne.s32.totalorder %s163, %s165
      %p172 = scmp.eq.s32.totalorder %s29, 7
      %p173 = por %p171, %p172
      %p174 = scmp.ne.s32.totalorder %s165, %s166
      %p175 = scmp.eq.s32.totalorder %s29, 0
      %p176 = por %p174, %p175
      %p177 = scmp.ne.s32.totalorder %s165, %s166
      %p178 = scmp.eq.s32.totalorder %s30, 7
      %p179 = por %p177, %p178
      %p181 = scmp.ne.s32.totalorder %s166, %s180
      %p182 = scmp.eq.s32.totalorder %s30, 0
      %p183 = por %p181, %p182
      %s185 = sadd.s32 %s184, 1
      %p188 = scmp.eq.s32.totalorder %s24, 7
      %p189 = scmp.ne.s32.totalorder %s184, %s186
      %p190 = scmp.eq.s32.totalorder %s24, 0
      %p191 = por %p189, %p190
      %p192 = scmp.ne.s32.totalorder %s184, %s186
      %p193 = scmp.eq.s32.totalorder %s29, 7
      %p194 = por %p192, %p193
      %p195 = scmp.ne.s32.totalorder %s186, %s187
      %p196 = scmp.eq.s32.totalorder %s29, 0
      %p197 = por %p195, %p196
      %p198 = scmp.ne.s32.totalorder %s186, %s187
      %p199 = scmp.eq.s32.totalorder %s30, 7
      %p200 = por %p198, %p199
      %p202 = scmp.ne.s32.totalorder %s187, %s201
      %p203 = scmp.eq.s32.totalorder %s30, 0
      %p204 = por %p202, %p203
      %s206 = sadd.s32 %s205, 1
      %p209 = scmp.eq.s32.totalorder %s24, 7
      %p210 = scmp.ne.s32.totalorder %s205, %s207
      %p211 = scmp.eq.s32.totalorder %s24, 0
      %p212 = por %p210, %p211
      %p213 = scmp.ne.s32.totalorder %s205, %s207
      %p214 = scmp.eq.s32.totalorder %s29, 7
      %p215 = por %p213, %p214
      %p216 = scmp.ne.s32.totalorder %s207, %s208
      %p217 = scmp.eq.s32.totalorder %s29, 0
      %p218 = por %p216, %p217
      %p219 = scmp.ne.s32.totalorder %s207, %s208
      %p220 = scmp.eq.s32.totalorder %s30, 7
      %p221 = por %p219, %p220
      %p223 = scmp.ne.s32.totalorder %s208, %s222
      %p224 = scmp.eq.s32.totalorder %s30, 0
      %p225 = por %p223, %p224
      %s227 = sadd.s32 %s226, 1
      %p230 = scmp.eq.s32.totalorder %s24, 7
      %p231 = scmp.ne.s32.totalorder %s226, %s228
      %p232 = scmp.eq.s32.totalorder %s24, 0
      %p233 = por %p231, %p232
      %p234 = scmp.ne.s32.totalorder %s226, %s228
      %p235 = scmp.eq.s32.totalorder %s29, 7
      %p236 = por %p234, %p235
      %p237 = scmp.ne.s32.totalorder %s228, %s229
      %p238 = scmp.eq.s32.totalorder %s29, 0
      %p239 = por %p237, %p238
      %p240 = scmp.ne.s32.totalorder %s228, %s229
      %p241 = scmp.eq.s32.totalorder %s30, 7
      %p242 = por %p240, %p241
      %p244 = scmp.ne.s32.totalorder %s229, %s243
      %p245 = scmp.eq.s32.totalorder %s30, 0
      %p246 = por %p244, %p245
      %s248 = sadd.s32 %s247, 1
      %p251 = scmp.eq.s32.totalorder %s24, 7
      %p252 = scmp.ne.s32.totalorder %s247, %s249
      %p253 = scmp.eq.s32.totalorder %s24, 0
      %p254 = por %p252, %p253
      %p255 = scmp.ne.s32.totalorder %s247, %s249
      %p256 = scmp.eq.s32.totalorder %s29, 7
      %p257 = por %p255, %p256
      %p258 = scmp.ne.s32.totalorder %s249, %s250
      %p259 = scmp.eq.s32.totalorder %s29, 0
      %p260 = por %p258, %p259
      %p261 = scmp.ne.s32.totalorder %s249, %s250
      %p262 = scmp.eq.s32.totalorder %s30, 7
      %p263 = por %p261, %p262
      %p265 = scmp.ne.s32.totalorder %s250, %s264
      %p266 = scmp.eq.s32.totalorder %s30, 0
      %p267 = por %p265, %p266
      %s269 = sadd.s32 %s268, 1
      %p272 = scmp.eq.s32.totalorder %s24, 7
      %p273 = scmp.ne.s32.totalorder %s268, %s270
      %p274 = scmp.eq.s32.totalorder %s24, 0
      %p275 = por %p273, %p274
      %p276 = scmp.ne.s32.totalorder %s268, %s270
      %p277 = scmp.eq.s32.totalorder %s29, 7
      %p278 = por %p276, %p277
      %p279 = scmp.ne.s32.totalorder %s270, %s271
      %p280 = scmp.eq.s32.totalorder %s29, 0
      %p281 = por %p279, %p280
      %p282 = scmp.ne.s32.totalorder %s270, %s271
      %p283 = scmp.eq.s32.totalorder %s30, 7
      %p284 = por %p282, %p283
      %p286 = scmp.ne.s32.totalorder %s271, %s285
      %p287 = scmp.eq.s32.totalorder %s30, 0
      %p288 = por %p286, %p287
      %s289 = ssub.s32 %s24, %s31
      %p290 = scmp.eq.s32.totalorder %s289, 0
      %s292 = sadd.s32 %s291, 1
      %s293 = scalar_select %p290, %s291, %s292
      %p296 = pneg %p290
      %p297 = scmp.eq.s32.totalorder %s24, 7
      %p298 = por %p296, %p297
      %p299 = scmp.ne.s32.totalorder %s291, %s294
      %p300 = scmp.eq.s32.totalorder %s24, 0
      %p301 = por %p299, %p300
      %p302 = scmp.ne.s32.totalorder %s291, %s294
      %p303 = scmp.eq.s32.totalorder %s29, 7
      %p304 = por %p302, %p303
      %p305 = scmp.ne.s32.totalorder %s294, %s295
      %p306 = scmp.eq.s32.totalorder %s29, 0
      %p307 = por %p305, %p306
      %p308 = scmp.ne.s32.totalorder %s294, %s295
      %p309 = scmp.eq.s32.totalorder %s30, 7
      %p310 = por %p308, %p309
      %p312 = scmp.ne.s32.totalorder %s295, %s311
      %p313 = scmp.eq.s32.totalorder %s30, 0
      %p314 = por %p312, %p313
      %p315 = scmp.le.s32.totalorder 1, %s24
      %p316 = scmp.lt.s32.totalorder %s24, 9
      %p317 = pnand %p315, %p316
      %p318 = pneg %p317
      // Predicated region
      $region9: #{discriminator_forward.1} parent=5 // pred_check
        _
      $region10: #{discriminator_forward.1} parent=5 // pred_check_branch
        %320 = sbr.rel (%p317) target = $region12
      $region11: #{discriminator_forward.1} parent=5 // pred_region
        %s321 = ssub.s32 %s24, 1
        // Predicated region
        $region13: #{discriminator_forward.1} parent=11 // pred_check
          %p322 = pneg %p71
        $region14: #{discriminator_forward.1} parent=11 // pred_check_branch
          %324 = sbr.rel (%p322) target = $region16
        $region15: #{discriminator_forward.1} parent=11 // pred_region
          _
        $region16: #{discriminator_forward.1} parent=11 // pred_fallthru
          _
        // Predicated region
        $region17: #{discriminator_forward.1} parent=11 // pred_check
          %p325 = pneg %p92
        $region18: #{discriminator_forward.1} parent=11 // pred_check_branch
          %327 = sbr.rel (%p325) target = $region20
        $region19: #{discriminator_forward.1} parent=11 // pred_region
          _
        $region20: #{discriminator_forward.1} parent=11 // pred_fallthru
          _
        // Predicated region
        $region21: #{discriminator_forward.1} parent=11 // pred_check
          %p328 = pneg %p113
        $region22: #{discriminator_forward.1} parent=11 // pred_check_branch
          %330 = sbr.rel (%p328) target = $region24
        $region23: #{discriminator_forward.1} parent=11 // pred_region
          _
        $region24: #{discriminator_forward.1} parent=11 // pred_fallthru
          _
        // Predicated region
        $region25: #{discriminator_forward.1} parent=11 // pred_check
          %p331 = pneg %p134
        $region26: #{discriminator_forward.1} parent=11 // pred_check_branch
          %333 = sbr.rel (%p331) target = $region28
        $region27: #{discriminator_forward.1} parent=11 // pred_region
          %s335 = ssub.s32 6144, 6144
          %336 = vsyncadd [#allocation4], %s335
          %s337 = sshll.u32 [#allocation3], 4
          %s338 = int_to_ptr.vmem [resolvable:$true] %s337
          %343 = dma.hbm_to_vmem [thread:$0]  %s4, 6144, %s338, [#allocation4], 128, 128, 8
        $region28: #{discriminator_forward.1} parent=11 // pred_fallthru
          _
        // Predicated region
        $region29: #{discriminator_forward.1} parent=11 // pred_check
          %p344 = pneg %p155
        $region30: #{discriminator_forward.1} parent=11 // pred_check_branch
          %346 = sbr.rel (%p344) target = $region32
        $region31: #{discriminator_forward.1} parent=11 // pred_region
          %s348 = ssub.s32 16, 16
          %349 = vsyncadd [#allocation6], %s348
          %s351 = sshll.u32 [#allocation5], 4
          %s352 = int_to_ptr.vmem [resolvable:$true] %s351
          %354 = dma.hbm_to_vmem [thread:$0]  %s5, 16, %s352, [#allocation6]
        $region32: #{discriminator_forward.1} parent=11 // pred_fallthru
          _
        // Predicated region
        $region33: #{discriminator_forward.1} parent=11 // pred_check
          %p355 = pneg %p176
        $region34: #{discriminator_forward.1} parent=11 // pred_check_branch
          %357 = sbr.rel (%p355) target = $region36
        $region35: #{discriminator_forward.1} parent=11 // pred_region
          %s359 = ssub.s32 6144, 6144
          %360 = vsyncadd [#allocation6], %s359
          %s361 = sshll.u32 [#allocation7], 4
          %s362 = int_to_ptr.vmem [resolvable:$true] %s361
          %367 = dma.hbm_to_vmem [thread:$0]  %s6, 6144, %s362, [#allocation6], 128, 128, 8
        $region36: #{discriminator_forward.1} parent=11 // pred_fallthru
          _
        // Predicated region
        $region37: #{discriminator_forward.1} parent=11 // pred_check
          %p368 = pneg %p197
        $region38: #{discriminator_forward.1} parent=11 // pred_check_branch
          %370 = sbr.rel (%p368) target = $region40
        $region39: #{discriminator_forward.1} parent=11 // pred_region
          %s372 = ssub.s32 16, 16
          %373 = vsyncadd [#allocation9], %s372
          %s375 = sshll.u32 [#allocation8], 4
          %s376 = int_to_ptr.vmem [resolvable:$true] %s375
          %378 = dma.hbm_to_vmem [thread:$0]  %s7, 16, %s376, [#allocation9]
        $region40: #{discriminator_forward.1} parent=11 // pred_fallthru
          _
        // Predicated region
        $region41: #{discriminator_forward.1} parent=11 // pred_check
          %p379 = pneg %p218
        $region42: #{discriminator_forward.1} parent=11 // pred_check_branch
          %381 = sbr.rel (%p379) target = $region44
        $region43: #{discriminator_forward.1} parent=11 // pred_region
          %s383 = ssub.s32 16, 16
          %384 = vsyncadd [#allocation9], %s383
          %s386 = sshll.u32 [#allocation10], 4
          %s387 = int_to_ptr.vmem [resolvable:$true] %s386
          %389 = dma.hbm_to_vmem [thread:$0]  %s8, 16, %s387, [#allocation9]
        $region44: #{discriminator_forward.1} parent=11 // pred_fallthru
          _
        // Predicated region
        $region45: #{discriminator_forward.1} parent=11 // pred_check
          %p390 = pneg %p239
        $region46: #{discriminator_forward.1} parent=11 // pred_check_branch
          %392 = sbr.rel (%p390) target = $region48
        $region47: #{discriminator_forward.1} parent=11 // pred_region
          %s394 = ssub.s32 16, 16
          %395 = vsyncadd [#allocation12], %s394
          %s397 = sshll.u32 [#allocation11], 4
          %s398 = int_to_ptr.vmem [resolvable:$true] %s397
          %400 = dma.hbm_to_vmem [thread:$0]  %s9, 16, %s398, [#allocation12]
        $region48: #{discriminator_forward.1} parent=11 // pred_fallthru
          _
        // Predicated region
        $region49: #{discriminator_forward.1} parent=11 // pred_check
          %p401 = pneg %p260
        $region50: #{discriminator_forward.1} parent=11 // pred_check_branch
          %403 = sbr.rel (%p401) target = $region52
        $region51: #{discriminator_forward.1} parent=11 // pred_region
          _
        $region52: #{discriminator_forward.1} parent=11 // pred_fallthru
          _
        // Predicated region
        $region53: #{discriminator_forward.1} parent=11 // pred_check
          %p404 = pneg %p281
        $region54: #{discriminator_forward.1} parent=11 // pred_check_branch
          %406 = sbr.rel (%p404) target = $region56
        $region55: #{discriminator_forward.1} parent=11 // pred_region
          _
        $region56: #{discriminator_forward.1} parent=11 // pred_fallthru
          _
      $region12: #{discriminator_forward.1} parent=5 // pred_fallthru
        _
      %p407 = scmp.lt.s32.totalorder %s24, 8
      // Predicated region
      $region57: #{discriminator_forward.1} parent=5 // pred_check
        %p408 = pneg %p407
      $region58: #{discriminator_forward.1} parent=5 // pred_check_branch
        %410 = sbr.rel (%p408) target = $region60
      $region59: #{discriminator_forward.1} parent=5 // pred_region
        // Predicated region
        $region61: #{discriminator_forward.1} parent=59 // pred_check
          %p411 = pneg %p44
        $region62: #{discriminator_forward.1} parent=59 // pred_check_branch
          %413 = sbr.rel (%p411) target = $region64
        $region63: #{discriminator_forward.1} parent=59 // pred_region
          %p414 = scmp.lt.s32.totalorder %s24, 7
          %s415 = scalar_select %p414, %s24, 7
          %s416 = smul.addr %s415, 2
          %s417 = scalar_lea.vmem %s0, %s416
        $region64: #{discriminator_forward.1} parent=59 // pred_fallthru
          _
      $region60: #{discriminator_forward.1} parent=5 // pred_fallthru
        _
      %p418 = scmp.le.s32.totalorder 1, %s24
      %p419 = scmp.lt.s32.totalorder %s24, 9
      %p420 = pnand %p418, %p419
      %p421 = pneg %p420
      // Predicated region
      $region65: #{discriminator_forward.1} parent=5 // pred_check
        _
      $region66: #{discriminator_forward.1} parent=5 // pred_check_branch
        %423 = sbr.rel (%p420) target = $region68
      $region67: #{discriminator_forward.1} parent=5 // pred_region
        %s424 = ssub.s32 %s24, 1
        // Predicated region
        $region69: #{discriminator_forward.1} parent=67 // pred_check
          %p425 = pneg %p134
        $region70: #{discriminator_forward.1} parent=67 // pred_check_branch
          %427 = sbr.rel (%p425) target = $region72
        $region71: #{discriminator_forward.1} parent=67 // pred_region
          %428 = dma.done [#allocation4], 6144
        $region72: #{discriminator_forward.1} parent=67 // pred_fallthru
          _
        // Predicated region
        $region73: #{discriminator_forward.1} parent=67 // pred_check
          %p429 = pneg %p155
        $region74: #{discriminator_forward.1} parent=67 // pred_check_branch
          %431 = sbr.rel (%p429) target = $region76
        $region75: #{discriminator_forward.1} parent=67 // pred_region
          %432 = dma.done [#allocation6], 16
        $region76: #{discriminator_forward.1} parent=67 // pred_fallthru
          _
        // Predicated region
        $region77: #{discriminator_forward.1} parent=67 // pred_check
          %p433 = pneg %p176
        $region78: #{discriminator_forward.1} parent=67 // pred_check_branch
          %435 = sbr.rel (%p433) target = $region80
        $region79: #{discriminator_forward.1} parent=67 // pred_region
          %436 = dma.done [#allocation6], 6144
        $region80: #{discriminator_forward.1} parent=67 // pred_fallthru
          _
        // Predicated region
        $region81: #{discriminator_forward.1} parent=67 // pred_check
          %p437 = pneg %p197
        $region82: #{discriminator_forward.1} parent=67 // pred_check_branch
          %439 = sbr.rel (%p437) target = $region84
        $region83: #{discriminator_forward.1} parent=67 // pred_region
          %440 = dma.done [#allocation9], 16
        $region84: #{discriminator_forward.1} parent=67 // pred_fallthru
          _
        // Predicated region
        $region85: #{discriminator_forward.1} parent=67 // pred_check
          %p441 = pneg %p218
        $region86: #{discriminator_forward.1} parent=67 // pred_check_branch
          %443 = sbr.rel (%p441) target = $region88
        $region87: #{discriminator_forward.1} parent=67 // pred_region
          %444 = dma.done [#allocation9], 16
        $region88: #{discriminator_forward.1} parent=67 // pred_fallthru
          _
        // Predicated region
        $region89: #{discriminator_forward.1} parent=67 // pred_check
          %p445 = pneg %p239
        $region90: #{discriminator_forward.1} parent=67 // pred_check_branch
          %447 = sbr.rel (%p445) target = $region92
        $region91: #{discriminator_forward.1} parent=67 // pred_region
          %448 = dma.done [#allocation12], 16
        $region92: #{discriminator_forward.1} parent=67 // pred_fallthru
          _
        %p449 = scmp.lt.s32.totalorder %s29, 7
        %s450 = scalar_select %p449, %s29, 7
        %s451 = smul.addr %s450, 2
        %s452 = scalar_lea.vmem %s0, %s451
        %p453 = pneg %p50
        %p454 = pneg %p47
        %p455 = pneg %p71
        %p456 = pneg %p68
        %p457 = pneg %p92
        %p458 = pneg %p89
        %p459 = pneg %p113
        %p460 = pneg %p110
        %p461 = pneg %p134
        %p462 = pneg %p131
        %p463 = pneg %p155
        %p464 = pneg %p152
        %p465 = pneg %p176
        %p466 = pneg %p173
        %p467 = pneg %p197
        %p468 = pneg %p194
        %p469 = pneg %p218
        %p470 = pneg %p215
        %p471 = pneg %p239
        %p472 = pneg %p236
        %p473 = pneg %p260
        %p474 = pneg %p257
        %p475 = pneg %p281
        %p476 = pneg %p278
        %p477 = pneg %p307
        %p478 = pneg %p304
        %p479 = scmp.lt.s32.totalorder %s29, 7
        %s480 = scalar_select %p479, %s29, 7
        %s481 = scalar_lea.vmem %s12, %s480
        %p482 = scmp.lt.s32.totalorder %s29, 7
        %s483 = scalar_select %p482, %s29, 7
        %s484 = smul.addr %s483, 2
        %s485 = scalar_lea.vmem %s0, %s484
        %p486 = scmp.lt.s32.totalorder %s29, 7
        %s487 = scalar_select %p486, %s29, 7
        %s488 = scalar_lea.vmem %s12, %s487
        %v489 = vld [vmem:[#allocation10] sm:$0x1]
        %v490 = vld [vmem:[#allocation11] sm:$0x1]
        %v491 = vld [vmem:[%s485] sm:$0x3]
        %v493 = vrot.slane %v491, 7
        %vm495 = vcmask 1040384
        %v496 = vsel %vm495, 0.0, %v493
        %v497 = vld [vmem:[%s1] sm:$0xff]
        %v498 = vld [vmem:[%s1 + $0x8] sm:$0xff]
        %v499 = vld [vmem:[%s1 + $0x10] sm:$0xff]
        %v500 = vld [vmem:[%s1 + $0x18] sm:$0xff]
        %v501 = vld [vmem:[%s2] sm:$0xff]
        %v502 = vld [vmem:[%s2 + $0x8] sm:$0xff]
        %v503 = vld [vmem:[%s2 + $0x10] sm:$0xff]
        %v504 = vld [vmem:[%s2 + $0x18] sm:$0xff]
        %vm505 = vcmask 64512
        %v507 = vsel %vm505, %v496, 0
        %509 = vmatprep.subr.mxu0 %v502
        %510 = vmatpush1.msra.mxu0 %v501
        %511 = vmatprep.subr.mxu0 0.0
        %512 = vmatpush1.msra.mxu0 0.0
        %513 = vmatprep.subr.mxu0 0.0
        %514 = vmatpush1.msra.mxu0 0.0
        %515 = vmatprep.subr.mxu0 0.0
        %516 = vmatpush1.msra.mxu0 0.0
        %517 = vmatprep.subr.mxu0 0.0
        %518 = vmatpush1.msra.mxu0 0.0
        %519 = vmatprep.subr.mxu0 0.0
        %520 = vmatpush1.msra.mxu0 0.0
        %521 = vmatprep.subr.mxu0 0.0
        %522 = vmatpush1.msra.mxu0 0.0
        %523 = vmatprep.subr.mxu0 0.0
        %524 = vmatpush1.msra.mxu0 0.0
        %525 = vmatprep.subr.mxu0 0.0
        %526 = vmatpush1.msra.mxu0 0.0
        %527 = vmatprep.subr.mxu0 0.0
        %528 = vmatpush1.msra.mxu0 0.0
        %529 = vmatprep.subr.mxu0 0.0
        %530 = vmatpush1.msra.mxu0 0.0
        %531 = vmatprep.subr.mxu0 0.0
        %532 = vmatpush1.msra.mxu0 0.0
        %533 = vmatprep.subr.mxu0 0.0
        %534 = vmatpush1.msra.mxu0 0.0
        %535 = vmatprep.subr.mxu0 0.0
        %536 = vmatpush1.msra.mxu0 0.0
        %537 = vmatprep.subr.mxu0 0.0
        %538 = vmatpush1.msra.mxu0 0.0
        %539 = vmatprep.subr.mxu0 0.0
        %540 = vmatpush1.msra.mxu0 0.0
        %541 = vmatprep.subr.mxu0 0.0
        %542 = vmatpush1.msra.mxu0 0.0
        %543 = vmatprep.subr.mxu0 0.0
        %544 = vmatpush1.msra.mxu0 0.0
        %545 = vmatprep.subr.mxu0 0.0
        %546 = vmatpush1.msra.mxu0 0.0
        %547 = vmatprep.subr.mxu0 0.0
        %548 = vmatpush1.msra.mxu0 0.0
        %549 = vmatprep.subr.mxu0 0.0
        %550 = vmatpush1.msra.mxu0 0.0
        %551 = vmatprep.subr.mxu0 0.0
        %552 = vmatpush1.msra.mxu0 0.0
        %553 = vmatprep.subr.mxu0 0.0
        %554 = vmatpush1.msra.mxu0 0.0
        %555 = vmatprep.subr.mxu0 0.0
        %556 = vmatpush1.msra.mxu0 0.0
        %557 = vmatprep.subr.mxu0 0.0
        %558 = vmatpush1.msra.mxu0 0.0
        %559 = vmatprep.subr.mxu0 0.0
        %560 = vmatpush1.msra.mxu0 0.0
        %561 = vmatprep.subr.mxu0 0.0
        %562 = vmatpush1.msra.mxu0 0.0
        %563 = vmatprep.subr.mxu0 0.0
        %564 = vmatpush1.msra.mxu0 0.0
        %565 = vmatprep.subr.mxu0 0.0
        %566 = vmatpush1.msra.mxu0 0.0
        %567 = vmatprep.subr.mxu0 0.0
        %568 = vmatpush1.msra.mxu0 0.0
        %569 = vmatprep.subr.mxu0 0.0
        %570 = vmatpush1.msra.mxu0 0.0
        %571 = vmatprep.subr.mxu0 0.0
        %572 = vmatpush1.msra.mxu0 0.0
        %573 = vmatprep.mubr.f32.mxu0 0.0
        %574 = vmatmul.mubr.f32.gmra.mrb[0].mxu0 %v507
        %v575 = vpop.f32.mrb[0].mxu0
        %v576 = vadd.f32 0.0, %v575
        %v577 = vpop.f32.mrb[0].mxu0
        %v578 = vadd.f32 0.0, %v577
        %579 = vdwg.mxu0
        %580 = vmatprep.subr.mxu0 %v504
        %581 = vmatpush1.msra.mxu0 %v503
        %582 = vmatprep.subr.mxu0 0.0
        %583 = vmatpush1.msra.mxu0 0.0
        %584 = vmatprep.subr.mxu0 0.0
        %585 = vmatpush1.msra.mxu0 0.0
        %586 = vmatprep.subr.mxu0 0.0
        %587 = vmatpush1.msra.mxu0 0.0
        %588 = vmatprep.subr.mxu0 0.0
        %589 = vmatpush1.msra.mxu0 0.0
        %590 = vmatprep.subr.mxu0 0.0
        %591 = vmatpush1.msra.mxu0 0.0
        %592 = vmatprep.subr.mxu0 0.0
        %593 = vmatpush1.msra.mxu0 0.0
        %594 = vmatprep.subr.mxu0 0.0
        %595 = vmatpush1.msra.mxu0 0.0
        %596 = vmatprep.subr.mxu0 0.0
        %597 = vmatpush1.msra.mxu0 0.0
        %598 = vmatprep.subr.mxu0 0.0
        %599 = vmatpush1.msra.mxu0 0.0
        %600 = vmatprep.subr.mxu0 0.0
        %601 = vmatpush1.msra.mxu0 0.0
        %602 = vmatprep.subr.mxu0 0.0
        %603 = vmatpush1.msra.mxu0 0.0
        %604 = vmatprep.subr.mxu0 0.0
        %605 = vmatpush1.msra.mxu0 0.0
        %606 = vmatprep.subr.mxu0 0.0
        %607 = vmatpush1.msra.mxu0 0.0
        %608 = vmatprep.subr.mxu0 0.0
        %609 = vmatpush1.msra.mxu0 0.0
        %610 = vmatprep.subr.mxu0 0.0
        %611 = vmatpush1.msra.mxu0 0.0
        %612 = vmatprep.subr.mxu0 0.0
        %613 = vmatpush1.msra.mxu0 0.0
        %614 = vmatprep.subr.mxu0 0.0
        %615 = vmatpush1.msra.mxu0 0.0
        %616 = vmatprep.subr.mxu0 0.0
        %617 = vmatpush1.msra.mxu0 0.0
        %618 = vmatprep.subr.mxu0 0.0
        %619 = vmatpush1.msra.mxu0 0.0
        %620 = vmatprep.subr.mxu0 0.0
        %621 = vmatpush1.msra.mxu0 0.0
        %622 = vmatprep.subr.mxu0 0.0
        %623 = vmatpush1.msra.mxu0 0.0
        %624 = vmatprep.subr.mxu0 0.0
        %625 = vmatpush1.msra.mxu0 0.0
        %626 = vmatprep.subr.mxu0 0.0
        %627 = vmatpush1.msra.mxu0 0.0
        %628 = vmatprep.subr.mxu0 0.0
        %629 = vmatpush1.msra.mxu0 0.0
        %630 = vmatprep.subr.mxu0 0.0
        %631 = vmatpush1.msra.mxu0 0.0
        %632 = vmatprep.subr.mxu0 0.0
        %633 = vmatpush1.msra.mxu0 0.0
        %634 = vmatprep.subr.mxu0 0.0
        %635 = vmatpush1.msra.mxu0 0.0
        %636 = vmatprep.subr.mxu0 0.0
        %637 = vmatpush1.msra.mxu0 0.0
        %638 = vmatprep.subr.mxu0 0.0
        %639 = vmatpush1.msra.mxu0 0.0
        %640 = vmatprep.subr.mxu0 0.0
        %641 = vmatpush1.msra.mxu0 0.0
        %642 = vmatprep.subr.mxu0 0.0
        %643 = vmatpush1.msra.mxu0 0.0
        %644 = vmatprep.mubr.f32.mxu0 0.0
        %645 = vmatmul.mubr.f32.gmra.mrb[0].mxu0 %v507
        %v646 = vpop.f32.mrb[0].mxu0
        %v647 = vadd.f32 0.0, %v646
        %v648 = vpop.f32.mrb[0].mxu0
        %v649 = vadd.f32 0.0, %v648
        %650 = vdwg.mxu0
        %v651 = vsel %vm505, %v491, 0
        %653 = vmatprep.subr.mxu0 %v498
        %654 = vmatpush1.msra.mxu0 %v497
        %655 = vmatprep.subr.mxu0 0.0
        %656 = vmatpush1.msra.mxu0 0.0
        %657 = vmatprep.subr.mxu0 0.0
        %658 = vmatpush1.msra.mxu0 0.0
        %659 = vmatprep.subr.mxu0 0.0
        %660 = vmatpush1.msra.mxu0 0.0
        %661 = vmatprep.subr.mxu0 0.0
        %662 = vmatpush1.msra.mxu0 0.0
        %663 = vmatprep.subr.mxu0 0.0
        %664 = vmatpush1.msra.mxu0 0.0
        %665 = vmatprep.subr.mxu0 0.0
        %666 = vmatpush1.msra.mxu0 0.0
        %667 = vmatprep.subr.mxu0 0.0
        %668 = vmatpush1.msra.mxu0 0.0
        %669 = vmatprep.subr.mxu0 0.0
        %670 = vmatpush1.msra.mxu0 0.0
        %671 = vmatprep.subr.mxu0 0.0
        %672 = vmatpush1.msra.mxu0 0.0
        %673 = vmatprep.subr.mxu0 0.0
        %674 = vmatpush1.msra.mxu0 0.0
        %675 = vmatprep.subr.mxu0 0.0
        %676 = vmatpush1.msra.mxu0 0.0
        %677 = vmatprep.subr.mxu0 0.0
        %678 = vmatpush1.msra.mxu0 0.0
        %679 = vmatprep.subr.mxu0 0.0
        %680 = vmatpush1.msra.mxu0 0.0
        %681 = vmatprep.subr.mxu0 0.0
        %682 = vmatpush1.msra.mxu0 0.0
        %683 = vmatprep.subr.mxu0 0.0
        %684 = vmatpush1.msra.mxu0 0.0
        %685 = vmatprep.subr.mxu0 0.0
        %686 = vmatpush1.msra.mxu0 0.0
        %687 = vmatprep.subr.mxu0 0.0
        %688 = vmatpush1.msra.mxu0 0.0
        %689 = vmatprep.subr.mxu0 0.0
        %690 = vmatpush1.msra.mxu0 0.0
        %691 = vmatprep.subr.mxu0 0.0
        %692 = vmatpush1.msra.mxu0 0.0
        %693 = vmatprep.subr.mxu0 0.0
        %694 = vmatpush1.msra.mxu0 0.0
        %695 = vmatprep.subr.mxu0 0.0
        %696 = vmatpush1.msra.mxu0 0.0
        %697 = vmatprep.subr.mxu0 0.0
        %698 = vmatpush1.msra.mxu0 0.0
        %699 = vmatprep.subr.mxu0 0.0
        %700 = vmatpush1.msra.mxu0 0.0
        %701 = vmatprep.subr.mxu0 0.0
        %702 = vmatpush1.msra.mxu0 0.0
        %703 = vmatprep.subr.mxu0 0.0
        %704 = vmatpush1.msra.mxu0 0.0
        %705 = vmatprep.subr.mxu0 0.0
        %706 = vmatpush1.msra.mxu0 0.0
        %707 = vmatprep.subr.mxu0 0.0
        %708 = vmatpush1.msra.mxu0 0.0
        %709 = vmatprep.subr.mxu0 0.0
        %710 = vmatpush1.msra.mxu0 0.0
        %711 = vmatprep.subr.mxu0 0.0
        %712 = vmatpush1.msra.mxu0 0.0
        %713 = vmatprep.subr.mxu0 0.0
        %714 = vmatpush1.msra.mxu0 0.0
        %715 = vmatprep.subr.mxu0 0.0
        %716 = vmatpush1.msra.mxu0 0.0
        %717 = vmatprep.mubr.f32.mxu0 0.0
        %718 = vmatmul.mubr.f32.gmra.mrb[0].mxu0 %v651
        %v719 = vpop.f32.mrb[0].mxu0
        %v720 = vadd.f32 %v576, %v719
        %v721 = vpop.f32.mrb[0].mxu0
        %v722 = vadd.f32 %v578, %v721
        %723 = vdwg.mxu0
        %724 = vmatprep.subr.mxu0 %v500
        %725 = vmatpush1.msra.mxu0 %v499
        %726 = vmatprep.subr.mxu0 0.0
        %727 = vmatpush1.msra.mxu0 0.0
        %728 = vmatprep.subr.mxu0 0.0
        %729 = vmatpush1.msra.mxu0 0.0
        %730 = vmatprep.subr.mxu0 0.0
        %731 = vmatpush1.msra.mxu0 0.0
        %732 = vmatprep.subr.mxu0 0.0
        %733 = vmatpush1.msra.mxu0 0.0
        %734 = vmatprep.subr.mxu0 0.0
        %735 = vmatpush1.msra.mxu0 0.0
        %736 = vmatprep.subr.mxu0 0.0
        %737 = vmatpush1.msra.mxu0 0.0
        %738 = vmatprep.subr.mxu0 0.0
        %739 = vmatpush1.msra.mxu0 0.0
        %740 = vmatprep.subr.mxu0 0.0
        %741 = vmatpush1.msra.mxu0 0.0
        %742 = vmatprep.subr.mxu0 0.0
        %743 = vmatpush1.msra.mxu0 0.0
        %744 = vmatprep.subr.mxu0 0.0
        %745 = vmatpush1.msra.mxu0 0.0
        %746 = vmatprep.subr.mxu0 0.0
        %747 = vmatpush1.msra.mxu0 0.0
        %748 = vmatprep.subr.mxu0 0.0
        %749 = vmatpush1.msra.mxu0 0.0
        %750 = vmatprep.subr.mxu0 0.0
        %751 = vmatpush1.msra.mxu0 0.0
        %752 = vmatprep.subr.mxu0 0.0
        %753 = vmatpush1.msra.mxu0 0.0
        %754 = vmatprep.subr.mxu0 0.0
        %755 = vmatpush1.msra.mxu0 0.0
        %756 = vmatprep.subr.mxu0 0.0
        %757 = vmatpush1.msra.mxu0 0.0
        %758 = vmatprep.subr.mxu0 0.0
        %759 = vmatpush1.msra.mxu0 0.0
        %760 = vmatprep.subr.mxu0 0.0
        %761 = vmatpush1.msra.mxu0 0.0
        %762 = vmatprep.subr.mxu0 0.0
        %763 = vmatpush1.msra.mxu0 0.0
        %764 = vmatprep.subr.mxu0 0.0
        %765 = vmatpush1.msra.mxu0 0.0
        %766 = vmatprep.subr.mxu0 0.0
        %767 = vmatpush1.msra.mxu0 0.0
        %768 = vmatprep.subr.mxu0 0.0
        %769 = vmatpush1.msra.mxu0 0.0
        %770 = vmatprep.subr.mxu0 0.0
        %771 = vmatpush1.msra.mxu0 0.0
        %772 = vmatprep.subr.mxu0 0.0
        %773 = vmatpush1.msra.mxu0 0.0
        %774 = vmatprep.subr.mxu0 0.0
        %775 = vmatpush1.msra.mxu0 0.0
        %776 = vmatprep.subr.mxu0 0.0
        %777 = vmatpush1.msra.mxu0 0.0
        %778 = vmatprep.subr.mxu0 0.0
        %779 = vmatpush1.msra.mxu0 0.0
        %780 = vmatprep.subr.mxu0 0.0
        %781 = vmatpush1.msra.mxu0 0.0
        %782 = vmatprep.subr.mxu0 0.0
        %783 = vmatpush1.msra.mxu0 0.0
        %784 = vmatprep.subr.mxu0 0.0
        %785 = vmatpush1.msra.mxu0 0.0
        %786 = vmatprep.subr.mxu0 0.0
        %787 = vmatpush1.msra.mxu0 0.0
        %788 = vmatprep.mubr.f32.mxu0 0.0
        %789 = vmatmul.mubr.f32.gmra.mrb[0].mxu0 %v651
        %v790 = vpop.f32.mrb[0].mxu0
        %v791 = vadd.f32 %v647, %v790
        %v792 = vpop.f32.mrb[0].mxu0
        %v793 = vadd.f32 %v649, %v792
        %794 = vdwg.mxu0
        %v795 = vld [vmem:[%s3] sm:$0x1]
        %v797 = vlaneseq
        %v798 = vshrl.u32 %v797, 7
        %v799 = vsub.s32 0, %v798
        %v800 = vrot.slane %v795, %v799
        %v802 = vadd.f32 %v720, %v800
        %vm803 = vcmp.ge.f32.partialorder %v802, 0.0
        %v804 = vmul.f32 %v802, 0.2
        %v805 = vsel %vm803, %v802, %v804
        %v807 = vlaneseq
        %v808 = vshrl.u32 %v807, 7
        %v809 = vsub.s32 0, %v808
        %v810 = vrot.slane %v489, %v809
        %v812 = vmul.f32 %v805, %v810
        %v814 = vlaneseq
        %v815 = vshrl.u32 %v814, 7
        %v816 = vsub.s32 0, %v815
        %v817 = vrot.slane %v490, %v816
        %v819 = vadd.f32 %v812, %v817
        %v820 = vadd.f32 %v722, %v800
        %vm821 = vcmp.ge.f32.partialorder %v820, 0.0
        %v822 = vmul.f32 %v820, 0.2
        %v823 = vsel %vm821, %v820, %v822
        %v824 = vmul.f32 %v823, %v810
        %v825 = vadd.f32 %v824, %v817
        %v826 = vadd.f32 %v791, %v800
        %vm827 = vcmp.ge.f32.partialorder %v826, 0.0
        %v828 = vmul.f32 %v826, 0.2
        %v829 = vsel %vm827, %v826, %v828
        %v830 = vmul.f32 %v829, %v810
        %v831 = vadd.f32 %v830, %v817
        %v832 = vadd.f32 %v793, %v800
        %vm833 = vcmp.ge.f32.partialorder %v832, 0.0
        %v834 = vmul.f32 %v832, 0.2
        %v835 = vsel %vm833, %v832, %v834
        %v836 = vmul.f32 %v835, %v810
        %v837 = vadd.f32 %v836, %v817
        %v838 = vld [vmem:[#allocation5] sm:$0x1]
        %v840 = vrot.slane %v837, 7
        %v842 = vsel %vm495, 0.0, %v840
        %v843 = vld [vmem:[#allocation3] sm:$0xff]
        %v844 = vld [vmem:[#allocation3 + $0x8] sm:$0xff]
        %v845 = vld [vmem:[#allocation3 + $0x10] sm:$0xff]
        %v846 = vld [vmem:[#allocation3 + $0x18] sm:$0xff]
        %v847 = vld [vmem:[#allocation3 + $0x20] sm:$0xff]
        %v848 = vld [vmem:[#allocation3 + $0x28] sm:$0xff]
        %v849 = vld [vmem:[#allocation3 + $0x30] sm:$0xff]
        %v850 = vld [vmem:[#allocation3 + $0x38] sm:$0xff]
        %v851 = vld [vmem:[#allocation3 + $0x40] sm:$0xff]
        %v852 = vld [vmem:[#allocation3 + $0x48] sm:$0xff]
        %v853 = vld [vmem:[#allocation3 + $0x50] sm:$0xff]
        %v854 = vld [vmem:[#allocation3 + $0x58] sm:$0xff]
        %v855 = vld [vmem:[#allocation3 + $0x60] sm:$0xff]
        %v856 = vld [vmem:[#allocation3 + $0x68] sm:$0xff]
        %v857 = vld [vmem:[#allocation3 + $0x70] sm:$0xff]
        %v858 = vld [vmem:[#allocation3 + $0x78] sm:$0xff]
        %s859 = scalar_lea.vmem [#allocation3], 128
        %v860 = vld [vmem:[%s859] sm:$0xff]
        %v861 = vld [vmem:[%s859 + $0x8] sm:$0xff]
        %v862 = vld [vmem:[%s859 + $0x10] sm:$0xff]
        %v863 = vld [vmem:[%s859 + $0x18] sm:$0xff]
        %v864 = vld [vmem:[%s859 + $0x20] sm:$0xff]
        %v865 = vld [vmem:[%s859 + $0x28] sm:$0xff]
        %v866 = vld [vmem:[%s859 + $0x30] sm:$0xff]
        %v867 = vld [vmem:[%s859 + $0x38] sm:$0xff]
        %v868 = vld [vmem:[%s859 + $0x40] sm:$0xff]
        %v869 = vld [vmem:[%s859 + $0x48] sm:$0xff]
        %v870 = vld [vmem:[%s859 + $0x50] sm:$0xff]
        %v871 = vld [vmem:[%s859 + $0x58] sm:$0xff]
        %v872 = vld [vmem:[%s859 + $0x60] sm:$0xff]
        %v873 = vld [vmem:[%s859 + $0x68] sm:$0xff]
        %v874 = vld [vmem:[%s859 + $0x70] sm:$0xff]
        %v875 = vld [vmem:[%s859 + $0x78] sm:$0xff]
        %876 = vmatprep.subr.mxu0 0.0
        %877 = vmatpush1.msra.mxu0 %v860
        %878 = vmatprep.subr.mxu0 0.0
        %879 = vmatpush1.msra.mxu0 %v861
        %880 = vmatprep.subr.mxu0 0.0
        %881 = vmatpush1.msra.mxu0 %v862
        %882 = vmatprep.subr.mxu0 0.0
        %883 = vmatpush1.msra.mxu0 %v863
        %884 = vmatprep.subr.mxu0 0.0
        %885 = vmatpush1.msra.mxu0 %v864
        %886 = vmatprep.subr.mxu0 0.0
        %887 = vmatpush1.msra.mxu0 %v865
        %888 = vmatprep.subr.mxu0 0.0
        %889 = vmatpush1.msra.mxu0 %v866
        %890 = vmatprep.subr.mxu0 0.0
        %891 = vmatpush1.msra.mxu0 %v867
        %892 = vmatprep.subr.mxu0 0.0
        %893 = vmatpush1.msra.mxu0 %v868
        %894 = vmatprep.subr.mxu0 0.0
        %895 = vmatpush1.msra.mxu0 %v869
        %896 = vmatprep.subr.mxu0 0.0
        %897 = vmatpush1.msra.mxu0 %v870
        %898 = vmatprep.subr.mxu0 0.0
        %899 = vmatpush1.msra.mxu0 %v871
        %900 = vmatprep.subr.mxu0 0.0
        %901 = vmatpush1.msra.mxu0 %v872
        %902 = vmatprep.subr.mxu0 0.0
        %903 = vmatpush1.msra.mxu0 %v873
        %904 = vmatprep.subr.mxu0 0.0
        %905 = vmatpush1.msra.mxu0 %v874
        %906 = vmatprep.subr.mxu0 0.0
        %907 = vmatpush1.msra.mxu0 %v875
        %908 = vmatprep.subr.mxu0 0.0
        %909 = vmatpush1.msra.mxu0 0.0
        %910 = vmatprep.subr.mxu0 0.0
        %911 = vmatpush1.msra.mxu0 0.0
        %912 = vmatprep.subr.mxu0 0.0
        %913 = vmatpush1.msra.mxu0 0.0
        %914 = vmatprep.subr.mxu0 0.0
        %915 = vmatpush1.msra.mxu0 0.0
        %916 = vmatprep.subr.mxu0 0.0
        %917 = vmatpush1.msra.mxu0 0.0
        %918 = vmatprep.subr.mxu0 0.0
        %919 = vmatpush1.msra.mxu0 0.0
        %920 = vmatprep.subr.mxu0 0.0
        %921 = vmatpush1.msra.mxu0 0.0
        %922 = vmatprep.subr.mxu0 0.0
        %923 = vmatpush1.msra.mxu0 0.0
        %924 = vmatprep.subr.mxu0 0.0
        %925 = vmatpush1.msra.mxu0 0.0
        %926 = vmatprep.subr.mxu0 0.0
        %927 = vmatpush1.msra.mxu0 0.0
        %928 = vmatprep.subr.mxu0 0.0
        %929 = vmatpush1.msra.mxu0 0.0
        %930 = vmatprep.subr.mxu0 0.0
        %931 = vmatpush1.msra.mxu0 0.0
        %932 = vmatprep.subr.mxu0 0.0
        %933 = vmatpush1.msra.mxu0 0.0
        %934 = vmatprep.subr.mxu0 0.0
        %935 = vmatpush1.msra.mxu0 0.0
        %936 = vmatprep.subr.mxu0 0.0
        %937 = vmatpush1.msra.mxu0 0.0
        %938 = vmatprep.subr.mxu0 0.0
        %939 = vmatpush1.msra.mxu0 0.0
        %940 = vmatprep.mubr.f32.mxu0 0.0
        %941 = vmatmul.mubr.f32.gmra.mrb[0].mxu0 %v819
        %v942 = vpop.f32.mrb[0].mxu0
        %v943 = vadd.f32 0.0, %v942
        %v944 = vpop.f32.mrb[0].mxu0
        %945 = vdwg.mxu0
        %946 = vmatprep.subr.mxu0 0.0
        %947 = vmatpush1.msra.mxu0 %v843
        %948 = vmatprep.subr.mxu0 0.0
        %949 = vmatpush1.msra.mxu0 %v844
        %950 = vmatprep.subr.mxu0 0.0
        %951 = vmatpush1.msra.mxu0 %v845
        %952 = vmatprep.subr.mxu0 0.0
        %953 = vmatpush1.msra.mxu0 %v846
        %954 = vmatprep.subr.mxu0 0.0
        %955 = vmatpush1.msra.mxu0 %v847
        %956 = vmatprep.subr.mxu0 0.0
        %957 = vmatpush1.msra.mxu0 %v848
        %958 = vmatprep.subr.mxu0 0.0
        %959 = vmatpush1.msra.mxu0 %v849
        %960 = vmatprep.subr.mxu0 0.0
        %961 = vmatpush1.msra.mxu0 %v850
        %962 = vmatprep.subr.mxu0 0.0
        %963 = vmatpush1.msra.mxu0 %v851
        %964 = vmatprep.subr.mxu0 0.0
        %965 = vmatpush1.msra.mxu0 %v852
        %966 = vmatprep.subr.mxu0 0.0
        %967 = vmatpush1.msra.mxu0 %v853
        %968 = vmatprep.subr.mxu0 0.0
        %969 = vmatpush1.msra.mxu0 %v854
        %970 = vmatprep.subr.mxu0 0.0
        %971 = vmatpush1.msra.mxu0 %v855
        %972 = vmatprep.subr.mxu0 0.0
        %973 = vmatpush1.msra.mxu0 %v856
        %974 = vmatprep.subr.mxu0 0.0
        %975 = vmatpush1.msra.mxu0 %v857
        %976 = vmatprep.subr.mxu0 0.0
        %977 = vmatpush1.msra.mxu0 %v858
        %978 = vmatprep.subr.mxu0 0.0
        %979 = vmatpush1.msra.mxu0 0.0
        %980 = vmatprep.subr.mxu0 0.0
        %981 = vmatpush1.msra.mxu0 0.0
        %982 = vmatprep.subr.mxu0 0.0
        %983 = vmatpush1.msra.mxu0 0.0
        %984 = vmatprep.subr.mxu0 0.0
        %985 = vmatpush1.msra.mxu0 0.0
        %986 = vmatprep.subr.mxu0 0.0
        %987 = vmatpush1.msra.mxu0 0.0
        %988 = vmatprep.subr.mxu0 0.0
        %989 = vmatpush1.msra.mxu0 0.0
        %990 = vmatprep.subr.mxu0 0.0
        %991 = vmatpush1.msra.mxu0 0.0
        %992 = vmatprep.subr.mxu0 0.0
        %993 = vmatpush1.msra.mxu0 0.0
        %994 = vmatprep.subr.mxu0 0.0
        %995 = vmatpush1.msra.mxu0 0.0
        %996 = vmatprep.subr.mxu0 0.0
        %997 = vmatpush1.msra.mxu0 0.0
        %998 = vmatprep.subr.mxu0 0.0
        %999 = vmatpush1.msra.mxu0 0.0
        %1000 = vmatprep.subr.mxu0 0.0
        %1001 = vmatpush1.msra.mxu0 0.0
        %1002 = vmatprep.subr.mxu0 0.0
        %1003 = vmatpush1.msra.mxu0 0.0
        %1004 = vmatprep.subr.mxu0 0.0
        %1005 = vmatpush1.msra.mxu0 0.0
        %1006 = vmatprep.subr.mxu0 0.0
        %1007 = vmatpush1.msra.mxu0 0.0
        %1008 = vmatprep.subr.mxu0 0.0
        %1009 = vmatpush1.msra.mxu0 0.0
        %1010 = vmatprep.mubr.f32.mxu0 0.0
        %1011 = vmatmul.mubr.f32.gmra.mrb[0].mxu0 %v842
        %v1012 = vpop.f32.mrb[0].mxu0
        %v1013 = vadd.f32 %v943, %v1012
        %v1014 = vpop.f32.mrb[0].mxu0
        %1015 = vdwg.mxu0
        %s1016 = scalar_lea.vmem [#allocation3], 256
        %v1017 = vld [vmem:[%s1016] sm:$0xff]
        %v1018 = vld [vmem:[%s1016 + $0x8] sm:$0xff]
        %v1019 = vld [vmem:[%s1016 + $0x10] sm:$0xff]
        %v1020 = vld [vmem:[%s1016 + $0x18] sm:$0xff]
        %v1021 = vld [vmem:[%s1016 + $0x20] sm:$0xff]
        %v1022 = vld [vmem:[%s1016 + $0x28] sm:$0xff]
        %v1023 = vld [vmem:[%s1016 + $0x30] sm:$0xff]
        %v1024 = vld [vmem:[%s1016 + $0x38] sm:$0xff]
        %v1025 = vld [vmem:[%s1016 + $0x40] sm:$0xff]
        %v1026 = vld [vmem:[%s1016 + $0x48] sm:$0xff]
        %v1027 = vld [vmem:[%s1016 + $0x50] sm:$0xff]
        %v1028 = vld [vmem:[%s1016 + $0x58] sm:$0xff]
        %v1029 = vld [vmem:[%s1016 + $0x60] sm:$0xff]
        %v1030 = vld [vmem:[%s1016 + $0x68] sm:$0xff]
        %v1031 = vld [vmem:[%s1016 + $0x70] sm:$0xff]
        %v1032 = vld [vmem:[%s1016 + $0x78] sm:$0xff]
        %1033 = vmatprep.subr.mxu0 0.0
        %1034 = vmatpush1.msra.mxu0 %v1017
        %1035 = vmatprep.subr.mxu0 0.0
        %1036 = vmatpush1.msra.mxu0 %v1018
        %1037 = vmatprep.subr.mxu0 0.0
        %1038 = vmatpush1.msra.mxu0 %v1019
        %1039 = vmatprep.subr.mxu0 0.0
        %1040 = vmatpush1.msra.mxu0 %v1020
        %1041 = vmatprep.subr.mxu0 0.0
        %1042 = vmatpush1.msra.mxu0 %v1021
        %1043 = vmatprep.subr.mxu0 0.0
        %1044 = vmatpush1.msra.mxu0 %v1022
        %1045 = vmatprep.subr.mxu0 0.0
        %1046 = vmatpush1.msra.mxu0 %v1023
        %1047 = vmatprep.subr.mxu0 0.0
        %1048 = vmatpush1.msra.mxu0 %v1024
        %1049 = vmatprep.subr.mxu0 0.0
        %1050 = vmatpush1.msra.mxu0 %v1025
        %1051 = vmatprep.subr.mxu0 0.0
        %1052 = vmatpush1.msra.mxu0 %v1026
        %1053 = vmatprep.subr.mxu0 0.0
        %1054 = vmatpush1.msra.mxu0 %v1027
        %1055 = vmatprep.subr.mxu0 0.0
        %1056 = vmatpush1.msra.mxu0 %v1028
        %1057 = vmatprep.subr.mxu0 0.0
        %1058 = vmatpush1.msra.mxu0 %v1029
        %1059 = vmatprep.subr.mxu0 0.0
        %1060 = vmatpush1.msra.mxu0 %v1030
        %1061 = vmatprep.subr.mxu0 0.0
        %1062 = vmatpush1.msra.mxu0 %v1031
        %1063 = vmatprep.subr.mxu0 0.0
        %1064 = vmatpush1.msra.mxu0 %v1032
        %1065 = vmatprep.subr.mxu0 0.0
        %1066 = vmatpush1.msra.mxu0 0.0
        %1067 = vmatprep.subr.mxu0 0.0
        %1068 = vmatpush1.msra.mxu0 0.0
        %1069 = vmatprep.subr.mxu0 0.0
        %1070 = vmatpush1.msra.mxu0 0.0
        %1071 = vmatprep.subr.mxu0 0.0
        %1072 = vmatpush1.msra.mxu0 0.0
        %1073 = vmatprep.subr.mxu0 0.0
        %1074 = vmatpush1.msra.mxu0 0.0
        %1075 = vmatprep.subr.mxu0 0.0
        %1076 = vmatpush1.msra.mxu0 0.0
        %1077 = vmatprep.subr.mxu0 0.0
        %1078 = vmatpush1.msra.mxu0 0.0
        %1079 = vmatprep.subr.mxu0 0.0
        %1080 = vmatpush1.msra.mxu0 0.0
        %1081 = vmatprep.subr.mxu0 0.0
        %1082 = vmatpush1.msra.mxu0 0.0
        %1083 = vmatprep.subr.mxu0 0.0
        %1084 = vmatpush1.msra.mxu0 0.0
        %1085 = vmatprep.subr.mxu0 0.0
        %1086 = vmatpush1.msra.mxu0 0.0
        %1087 = vmatprep.subr.mxu0 0.0
        %1088 = vmatpush1.msra.mxu0 0.0
        %1089 = vmatprep.subr.mxu0 0.0
        %1090 = vmatpush1.msra.mxu0 0.0
        %1091 = vmatprep.subr.mxu0 0.0
        %1092 = vmatpush1.msra.mxu0 0.0
        %1093 = vmatprep.subr.mxu0 0.0
        %1094 = vmatpush1.msra.mxu0 0.0
        %1095 = vmatprep.subr.mxu0 0.0
        %1096 = vmatpush1.msra.mxu0 0.0
        %1097 = vmatprep.mubr.f32.mxu0 0.0
        %1098 = vmatmul.mubr.f32.gmra.mrb[0].mxu0 %v825
        %v1099 = vpop.f32.mrb[0].mxu0
        %v1100 = vadd.f32 0.0, %v1099
        %v1101 = vpop.f32.mrb[0].mxu0
        %1102 = vdwg.mxu0
        %v1103 = vadd.f32 %v1013, %v1100
        %v1105 = vlaneseq
        %v1106 = vshrl.u32 %v1105, 7
        %v1107 = vsub.s32 0, %v1106
        %v1108 = vrot.slane %v838, %v1107
        %v1110 = vadd.f32 %v1103, %v1108
        %vm1111 = vcmp.ge.f32.partialorder %v1110, 0.0
        %v1112 = vmul.f32 %v1110, 0.2
        %v1113 = vsel %vm1111, %v1110, %v1112
        %v1114 = vmul.f32 %v1113, %v810
        %v1115 = vadd.f32 %v1114, %v817
        %1116 = vmatprep.subr.mxu0 0.0
        %1117 = vmatpush1.msra.mxu0 %v860
        %1118 = vmatprep.subr.mxu0 0.0
        %1119 = vmatpush1.msra.mxu0 %v861
        %1120 = vmatprep.subr.mxu0 0.0
        %1121 = vmatpush1.msra.mxu0 %v862
        %1122 = vmatprep.subr.mxu0 0.0
        %1123 = vmatpush1.msra.mxu0 %v863
        %1124 = vmatprep.subr.mxu0 0.0
        %1125 = vmatpush1.msra.mxu0 %v864
        %1126 = vmatprep.subr.mxu0 0.0
        %1127 = vmatpush1.msra.mxu0 %v865
        %1128 = vmatprep.subr.mxu0 0.0
        %1129 = vmatpush1.msra.mxu0 %v866
        %1130 = vmatprep.subr.mxu0 0.0
        %1131 = vmatpush1.msra.mxu0 %v867
        %1132 = vmatprep.subr.mxu0 0.0
        %1133 = vmatpush1.msra.mxu0 %v868
        %1134 = vmatprep.subr.mxu0 0.0
        %1135 = vmatpush1.msra.mxu0 %v869
        %1136 = vmatprep.subr.mxu0 0.0
        %1137 = vmatpush1.msra.mxu0 %v870
        %1138 = vmatprep.subr.mxu0 0.0
        %1139 = vmatpush1.msra.mxu0 %v871
        %1140 = vmatprep.subr.mxu0 0.0
        %1141 = vmatpush1.msra.mxu0 %v872
        %1142 = vmatprep.subr.mxu0 0.0
        %1143 = vmatpush1.msra.mxu0 %v873
        %1144 = vmatprep.subr.mxu0 0.0
        %1145 = vmatpush1.msra.mxu0 %v874
        %1146 = vmatprep.subr.mxu0 0.0
        %1147 = vmatpush1.msra.mxu0 %v875
        %1148 = vmatprep.subr.mxu0 0.0
        %1149 = vmatpush1.msra.mxu0 0.0
        %1150 = vmatprep.subr.mxu0 0.0
        %1151 = vmatpush1.msra.mxu0 0.0
        %1152 = vmatprep.subr.mxu0 0.0
        %1153 = vmatpush1.msra.mxu0 0.0
        %1154 = vmatprep.subr.mxu0 0.0
        %1155 = vmatpush1.msra.mxu0 0.0
        %1156 = vmatprep.subr.mxu0 0.0
        %1157 = vmatpush1.msra.mxu0 0.0
        %1158 = vmatprep.subr.mxu0 0.0
        %1159 = vmatpush1.msra.mxu0 0.0
        %1160 = vmatprep.subr.mxu0 0.0
        %1161 = vmatpush1.msra.mxu0 0.0
        %1162 = vmatprep.subr.mxu0 0.0
        %1163 = vmatpush1.msra.mxu0 0.0
        %1164 = vmatprep.subr.mxu0 0.0
        %1165 = vmatpush1.msra.mxu0 0.0
        %1166 = vmatprep.subr.mxu0 0.0
        %1167 = vmatpush1.msra.mxu0 0.0
        %1168 = vmatprep.subr.mxu0 0.0
        %1169 = vmatpush1.msra.mxu0 0.0
        %1170 = vmatprep.subr.mxu0 0.0
        %1171 = vmatpush1.msra.mxu0 0.0
        %1172 = vmatprep.subr.mxu0 0.0
        %1173 = vmatpush1.msra.mxu0 0.0
        %1174 = vmatprep.subr.mxu0 0.0
        %1175 = vmatpush1.msra.mxu0 0.0
        %1176 = vmatprep.subr.mxu0 0.0
        %1177 = vmatpush1.msra.mxu0 0.0
        %1178 = vmatprep.subr.mxu0 0.0
        %1179 = vmatpush1.msra.mxu0 0.0
        %1180 = vmatprep.mubr.f32.mxu0 0.0
        %1181 = vmatmul.mubr.f32.gmra.mrb[0].mxu0 %v831
        %v1182 = vpop.f32.mrb[0].mxu0
        %v1183 = vadd.f32 0.0, %v1182
        %v1184 = vpop.f32.mrb[0].mxu0
        %1185 = vdwg.mxu0
        %1186 = vmatprep.subr.mxu0 0.0
        %1187 = vmatpush1.msra.mxu0 %v843
        %1188 = vmatprep.subr.mxu0 0.0
        %1189 = vmatpush1.msra.mxu0 %v844
        %1190 = vmatprep.subr.mxu0 0.0
        %1191 = vmatpush1.msra.mxu0 %v845
        %1192 = vmatprep.subr.mxu0 0.0
        %1193 = vmatpush1.msra.mxu0 %v846
        %1194 = vmatprep.subr.mxu0 0.0
        %1195 = vmatpush1.msra.mxu0 %v847
        %1196 = vmatprep.subr.mxu0 0.0
        %1197 = vmatpush1.msra.mxu0 %v848
        %1198 = vmatprep.subr.mxu0 0.0
        %1199 = vmatpush1.msra.mxu0 %v849
        %1200 = vmatprep.subr.mxu0 0.0
        %1201 = vmatpush1.msra.mxu0 %v850
        %1202 = vmatprep.subr.mxu0 0.0
        %1203 = vmatpush1.msra.mxu0 %v851
        %1204 = vmatprep.subr.mxu0 0.0
        %1205 = vmatpush1.msra.mxu0 %v852
        %1206 = vmatprep.subr.mxu0 0.0
        %1207 = vmatpush1.msra.mxu0 %v853
        %1208 = vmatprep.subr.mxu0 0.0
        %1209 = vmatpush1.msra.mxu0 %v854
        %1210 = vmatprep.subr.mxu0 0.0
        %1211 = vmatpush1.msra.mxu0 %v855
        %1212 = vmatprep.subr.mxu0 0.0
        %1213 = vmatpush1.msra.mxu0 %v856
        %1214 = vmatprep.subr.mxu0 0.0
        %1215 = vmatpush1.msra.mxu0 %v857
        %1216 = vmatprep.subr.mxu0 0.0
        %1217 = vmatpush1.msra.mxu0 %v858
        %1218 = vmatprep.subr.mxu0 0.0
        %1219 = vmatpush1.msra.mxu0 0.0
        %1220 = vmatprep.subr.mxu0 0.0
        %1221 = vmatpush1.msra.mxu0 0.0
        %1222 = vmatprep.subr.mxu0 0.0
        %1223 = vmatpush1.msra.mxu0 0.0
        %1224 = vmatprep.subr.mxu0 0.0
        %1225 = vmatpush1.msra.mxu0 0.0
        %1226 = vmatprep.subr.mxu0 0.0
        %1227 = vmatpush1.msra.mxu0 0.0
        %1228 = vmatprep.subr.mxu0 0.0
        %1229 = vmatpush1.msra.mxu0 0.0
        %1230 = vmatprep.subr.mxu0 0.0
        %1231 = vmatpush1.msra.mxu0 0.0
        %1232 = vmatprep.subr.mxu0 0.0
        %1233 = vmatpush1.msra.mxu0 0.0
        %1234 = vmatprep.subr.mxu0 0.0
        %1235 = vmatpush1.msra.mxu0 0.0
        %1236 = vmatprep.subr.mxu0 0.0
        %1237 = vmatpush1.msra.mxu0 0.0
        %1238 = vmatprep.subr.mxu0 0.0
        %1239 = vmatpush1.msra.mxu0 0.0
        %1240 = vmatprep.subr.mxu0 0.0
        %1241 = vmatpush1.msra.mxu0 0.0
        %1242 = vmatprep.subr.mxu0 0.0
        %1243 = vmatpush1.msra.mxu0 0.0
        %1244 = vmatprep.subr.mxu0 0.0
        %1245 = vmatpush1.msra.mxu0 0.0
        %1246 = vmatprep.subr.mxu0 0.0
        %1247 = vmatpush1.msra.mxu0 0.0
        %1248 = vmatprep.subr.mxu0 0.0
        %1249 = vmatpush1.msra.mxu0 0.0
        %1250 = vmatprep.mubr.f32.mxu0 0.0
        %1251 = vmatmul.mubr.f32.gmra.mrb[0].mxu0 %v825
        %v1252 = vpop.f32.mrb[0].mxu0
        %v1253 = vadd.f32 %v1183, %v1252
        %v1254 = vpop.f32.mrb[0].mxu0
        %1255 = vdwg.mxu0
        %1256 = vmatprep.subr.mxu0 0.0
        %1257 = vmatpush1.msra.mxu0 %v1017
        %1258 = vmatprep.subr.mxu0 0.0
        %1259 = vmatpush1.msra.mxu0 %v1018
        %1260 = vmatprep.subr.mxu0 0.0
        %1261 = vmatpush1.msra.mxu0 %v1019
        %1262 = vmatprep.subr.mxu0 0.0
        %1263 = vmatpush1.msra.mxu0 %v1020
        %1264 = vmatprep.subr.mxu0 0.0
        %1265 = vmatpush1.msra.mxu0 %v1021
        %1266 = vmatprep.subr.mxu0 0.0
        %1267 = vmatpush1.msra.mxu0 %v1022
        %1268 = vmatprep.subr.mxu0 0.0
        %1269 = vmatpush1.msra.mxu0 %v1023
        %1270 = vmatprep.subr.mxu0 0.0
        %1271 = vmatpush1.msra.mxu0 %v1024
        %1272 = vmatprep.subr.mxu0 0.0
        %1273 = vmatpush1.msra.mxu0 %v1025
        %1274 = vmatprep.subr.mxu0 0.0
        %1275 = vmatpush1.msra.mxu0 %v1026
        %1276 = vmatprep.subr.mxu0 0.0
        %1277 = vmatpush1.msra.mxu0 %v1027
        %1278 = vmatprep.subr.mxu0 0.0
        %1279 = vmatpush1.msra.mxu0 %v1028
        %1280 = vmatprep.subr.mxu0 0.0
        %1281 = vmatpush1.msra.mxu0 %v1029
        %1282 = vmatprep.subr.mxu0 0.0
        %1283 = vmatpush1.msra.mxu0 %v1030
        %1284 = vmatprep.subr.mxu0 0.0
        %1285 = vmatpush1.msra.mxu0 %v1031
        %1286 = vmatprep.subr.mxu0 0.0
        %1287 = vmatpush1.msra.mxu0 %v1032
        %1288 = vmatprep.subr.mxu0 0.0
        %1289 = vmatpush1.msra.mxu0 0.0
        %1290 = vmatprep.subr.mxu0 0.0
        %1291 = vmatpush1.msra.mxu0 0.0
        %1292 = vmatprep.subr.mxu0 0.0
        %1293 = vmatpush1.msra.mxu0 0.0
        %1294 = vmatprep.subr.mxu0 0.0
        %1295 = vmatpush1.msra.mxu0 0.0
        %1296 = vmatprep.subr.mxu0 0.0
        %1297 = vmatpush1.msra.mxu0 0.0
        %1298 = vmatprep.subr.mxu0 0.0
        %1299 = vmatpush1.msra.mxu0 0.0
        %1300 = vmatprep.subr.mxu0 0.0
        %1301 = vmatpush1.msra.mxu0 0.0
        %1302 = vmatprep.subr.mxu0 0.0
        %1303 = vmatpush1.msra.mxu0 0.0
        %1304 = vmatprep.subr.mxu0 0.0
        %1305 = vmatpush1.msra.mxu0 0.0
        %1306 = vmatprep.subr.mxu0 0.0
        %1307 = vmatpush1.msra.mxu0 0.0
        %1308 = vmatprep.subr.mxu0 0.0
        %1309 = vmatpush1.msra.mxu0 0.0
        %1310 = vmatprep.subr.mxu0 0.0
        %1311 = vmatpush1.msra.mxu0 0.0
        %1312 = vmatprep.subr.mxu0 0.0
        %1313 = vmatpush1.msra.mxu0 0.0
        %1314 = vmatprep.subr.mxu0 0.0
        %1315 = vmatpush1.msra.mxu0 0.0
        %1316 = vmatprep.subr.mxu0 0.0
        %1317 = vmatpush1.msra.mxu0 0.0
        %1318 = vmatprep.subr.mxu0 0.0
        %1319 = vmatpush1.msra.mxu0 0.0
        %1320 = vmatprep.mubr.f32.mxu0 0.0
        %1321 = vmatmul.mubr.f32.gmra.mrb[0].mxu0 %v837
        %v1322 = vpop.f32.mrb[0].mxu0
        %v1323 = vadd.f32 0.0, %v1322
        %v1324 = vpop.f32.mrb[0].mxu0
        %1325 = vdwg.mxu0
        %v1326 = vadd.f32 %v1253, %v1323
        %v1327 = vadd.f32 %v1326, %v1108
        %vm1328 = vcmp.ge.f32.partialorder %v1327, 0.0
        %v1329 = vmul.f32 %v1327, 0.2
        %v1330 = vsel %vm1328, %v1327, %v1329
        %v1331 = vmul.f32 %v1330, %v810
        %v1332 = vadd.f32 %v1331, %v817
        %v1334 = vrot.slane %v1332, 7
        %v1336 = vsel %vm495, 0.0, %v1334
        %v1337 = vld [vmem:[#allocation7] sm:$0xff]
        %v1338 = vld [vmem:[#allocation7 + $0x8] sm:$0xff]
        %v1339 = vld [vmem:[#allocation7 + $0x10] sm:$0xff]
        %v1340 = vld [vmem:[#allocation7 + $0x18] sm:$0xff]
        %v1341 = vld [vmem:[#allocation7 + $0x20] sm:$0xff]
        %v1342 = vld [vmem:[#allocation7 + $0x28] sm:$0xff]
        %v1343 = vld [vmem:[#allocation7 + $0x30] sm:$0xff]
        %v1344 = vld [vmem:[#allocation7 + $0x38] sm:$0xff]
        %v1345 = vld [vmem:[#allocation7 + $0x40] sm:$0xff]
        %v1346 = vld [vmem:[#allocation7 + $0x48] sm:$0xff]
        %v1347 = vld [vmem:[#allocation7 + $0x50] sm:$0xff]
        %v1348 = vld [vmem:[#allocation7 + $0x58] sm:$0xff]
        %v1349 = vld [vmem:[#allocation7 + $0x60] sm:$0xff]
        %v1350 = vld [vmem:[#allocation7 + $0x68] sm:$0xff]
        %v1351 = vld [vmem:[#allocation7 + $0x70] sm:$0xff]
        %v1352 = vld [vmem:[#allocation7 + $0x78] sm:$0xff]
        %s1353 = scalar_lea.vmem [#allocation7], 128
        %v1354 = vld [vmem:[%s1353] sm:$0xff]
        %v1355 = vld [vmem:[%s1353 + $0x8] sm:$0xff]
        %v1356 = vld [vmem:[%s1353 + $0x10] sm:$0xff]
        %v1357 = vld [vmem:[%s1353 + $0x18] sm:$0xff]
        %v1358 = vld [vmem:[%s1353 + $0x20] sm:$0xff]
        %v1359 = vld [vmem:[%s1353 + $0x28] sm:$0xff]
        %v1360 = vld [vmem:[%s1353 + $0x30] sm:$0xff]
        %v1361 = vld [vmem:[%s1353 + $0x38] sm:$0xff]
        %v1362 = vld [vmem:[%s1353 + $0x40] sm:$0xff]
        %v1363 = vld [vmem:[%s1353 + $0x48] sm:$0xff]
        %v1364 = vld [vmem:[%s1353 + $0x50] sm:$0xff]
        %v1365 = vld [vmem:[%s1353 + $0x58] sm:$0xff]
        %v1366 = vld [vmem:[%s1353 + $0x60] sm:$0xff]
        %v1367 = vld [vmem:[%s1353 + $0x68] sm:$0xff]
        %v1368 = vld [vmem:[%s1353 + $0x70] sm:$0xff]
        %v1369 = vld [vmem:[%s1353 + $0x78] sm:$0xff]
        %1370 = vmatprep.subr.mxu0 0.0
        %1371 = vmatpush1.msra.mxu0 %v1354
        %1372 = vmatprep.subr.mxu0 0.0
        %1373 = vmatpush1.msra.mxu0 %v1355
        %1374 = vmatprep.subr.mxu0 0.0
        %1375 = vmatpush1.msra.mxu0 %v1356
        %1376 = vmatprep.subr.mxu0 0.0
        %1377 = vmatpush1.msra.mxu0 %v1357
        %1378 = vmatprep.subr.mxu0 0.0
        %1379 = vmatpush1.msra.mxu0 %v1358
        %1380 = vmatprep.subr.mxu0 0.0
        %1381 = vmatpush1.msra.mxu0 %v1359
        %1382 = vmatprep.subr.mxu0 0.0
        %1383 = vmatpush1.msra.mxu0 %v1360
        %1384 = vmatprep.subr.mxu0 0.0
        %1385 = vmatpush1.msra.mxu0 %v1361
        %1386 = vmatprep.subr.mxu0 0.0
        %1387 = vmatpush1.msra.mxu0 %v1362
        %1388 = vmatprep.subr.mxu0 0.0
        %1389 = vmatpush1.msra.mxu0 %v1363
        %1390 = vmatprep.subr.mxu0 0.0
        %1391 = vmatpush1.msra.mxu0 %v1364
        %1392 = vmatprep.subr.mxu0 0.0
        %1393 = vmatpush1.msra.mxu0 %v1365
        %1394 = vmatprep.subr.mxu0 0.0
        %1395 = vmatpush1.msra.mxu0 %v1366
        %1396 = vmatprep.subr.mxu0 0.0
        %1397 = vmatpush1.msra.mxu0 %v1367
        %1398 = vmatprep.subr.mxu0 0.0
        %1399 = vmatpush1.msra.mxu0 %v1368
        %1400 = vmatprep.subr.mxu0 0.0
        %1401 = vmatpush1.msra.mxu0 %v1369
        %1402 = vmatprep.subr.mxu0 0.0
        %1403 = vmatpush1.msra.mxu0 0.0
        %1404 = vmatprep.subr.mxu0 0.0
        %1405 = vmatpush1.msra.mxu0 0.0
        %1406 = vmatprep.subr.mxu0 0.0
        %1407 = vmatpush1.msra.mxu0 0.0
        %1408 = vmatprep.subr.mxu0 0.0
        %1409 = vmatpush1.msra.mxu0 0.0
        %1410 = vmatprep.subr.mxu0 0.0
        %1411 = vmatpush1.msra.mxu0 0.0
        %1412 = vmatprep.subr.mxu0 0.0
        %1413 = vmatpush1.msra.mxu0 0.0
        %1414 = vmatprep.subr.mxu0 0.0
        %1415 = vmatpush1.msra.mxu0 0.0
        %1416 = vmatprep.subr.mxu0 0.0
        %1417 = vmatpush1.msra.mxu0 0.0
        %1418 = vmatprep.subr.mxu0 0.0
        %1419 = vmatpush1.msra.mxu0 0.0
        %1420 = vmatprep.subr.mxu0 0.0
        %1421 = vmatpush1.msra.mxu0 0.0
        %1422 = vmatprep.subr.mxu0 0.0
        %1423 = vmatpush1.msra.mxu0 0.0
        %1424 = vmatprep.subr.mxu0 0.0
        %1425 = vmatpush1.msra.mxu0 0.0
        %1426 = vmatprep.subr.mxu0 0.0
        %1427 = vmatpush1.msra.mxu0 0.0
        %1428 = vmatprep.subr.mxu0 0.0
        %1429 = vmatpush1.msra.mxu0 0.0
        %1430 = vmatprep.subr.mxu0 0.0
        %1431 = vmatpush1.msra.mxu0 0.0
        %1432 = vmatprep.subr.mxu0 0.0
        %1433 = vmatpush1.msra.mxu0 0.0
        %1434 = vmatprep.mubr.f32.mxu0 0.0
        %1435 = vmatmul.mubr.f32.gmra.mrb[0].mxu0 %v1115
        %v1436 = vpop.f32.mrb[0].mxu0
        %v1437 = vadd.f32 0.0, %v1436
        %v1438 = vpop.f32.mrb[0].mxu0
        %1439 = vdwg.mxu0
        %1440 = vmatprep.subr.mxu0 0.0
        %1441 = vmatpush1.msra.mxu0 %v1337
        %1442 = vmatprep.subr.mxu0 0.0
        %1443 = vmatpush1.msra.mxu0 %v1338
        %1444 = vmatprep.subr.mxu0 0.0
        %1445 = vmatpush1.msra.mxu0 %v1339
        %1446 = vmatprep.subr.mxu0 0.0
        %1447 = vmatpush1.msra.mxu0 %v1340
        %1448 = vmatprep.subr.mxu0 0.0
        %1449 = vmatpush1.msra.mxu0 %v1341
        %1450 = vmatprep.subr.mxu0 0.0
        %1451 = vmatpush1.msra.mxu0 %v1342
        %1452 = vmatprep.subr.mxu0 0.0
        %1453 = vmatpush1.msra.mxu0 %v1343
        %1454 = vmatprep.subr.mxu0 0.0
        %1455 = vmatpush1.msra.mxu0 %v1344
        %1456 = vmatprep.subr.mxu0 0.0
        %1457 = vmatpush1.msra.mxu0 %v1345
        %1458 = vmatprep.subr.mxu0 0.0
        %1459 = vmatpush1.msra.mxu0 %v1346
        %1460 = vmatprep.subr.mxu0 0.0
        %1461 = vmatpush1.msra.mxu0 %v1347
        %1462 = vmatprep.subr.mxu0 0.0
        %1463 = vmatpush1.msra.mxu0 %v1348
        %1464 = vmatprep.subr.mxu0 0.0
        %1465 = vmatpush1.msra.mxu0 %v1349
        %1466 = vmatprep.subr.mxu0 0.0
        %1467 = vmatpush1.msra.mxu0 %v1350
        %1468 = vmatprep.subr.mxu0 0.0
        %1469 = vmatpush1.msra.mxu0 %v1351
        %1470 = vmatprep.subr.mxu0 0.0
        %1471 = vmatpush1.msra.mxu0 %v1352
        %1472 = vmatprep.subr.mxu0 0.0
        %1473 = vmatpush1.msra.mxu0 0.0
        %1474 = vmatprep.subr.mxu0 0.0
        %1475 = vmatpush1.msra.mxu0 0.0
        %1476 = vmatprep.subr.mxu0 0.0
        %1477 = vmatpush1.msra.mxu0 0.0
        %1478 = vmatprep.subr.mxu0 0.0
        %1479 = vmatpush1.msra.mxu0 0.0
        %1480 = vmatprep.subr.mxu0 0.0
        %1481 = vmatpush1.msra.mxu0 0.0
        %1482 = vmatprep.subr.mxu0 0.0
        %1483 = vmatpush1.msra.mxu0 0.0
        %1484 = vmatprep.subr.mxu0 0.0
        %1485 = vmatpush1.msra.mxu0 0.0
        %1486 = vmatprep.subr.mxu0 0.0
        %1487 = vmatpush1.msra.mxu0 0.0
        %1488 = vmatprep.subr.mxu0 0.0
        %1489 = vmatpush1.msra.mxu0 0.0
        %1490 = vmatprep.subr.mxu0 0.0
        %1491 = vmatpush1.msra.mxu0 0.0
        %1492 = vmatprep.subr.mxu0 0.0
        %1493 = vmatpush1.msra.mxu0 0.0
        %1494 = vmatprep.subr.mxu0 0.0
        %1495 = vmatpush1.msra.mxu0 0.0
        %1496 = vmatprep.subr.mxu0 0.0
        %1497 = vmatpush1.msra.mxu0 0.0
        %1498 = vmatprep.subr.mxu0 0.0
        %1499 = vmatpush1.msra.mxu0 0.0
        %1500 = vmatprep.subr.mxu0 0.0
        %1501 = vmatpush1.msra.mxu0 0.0
        %1502 = vmatprep.subr.mxu0 0.0
        %1503 = vmatpush1.msra.mxu0 0.0
        %1504 = vmatprep.mubr.f32.mxu0 0.0
        %1505 = vmatmul.mubr.f32.gmra.mrb[0].mxu0 %v1336
        %v1506 = vpop.f32.mrb[0].mxu0
        %v1507 = vadd.f32 %v1437, %v1506
        %v1508 = vpop.f32.mrb[0].mxu0
        %1509 = vdwg.mxu0
        %s1510 = scalar_lea.vmem [#allocation7], 256
        %v1511 = vld [vmem:[%s1510] sm:$0xff]
        %v1512 = vld [vmem:[%s1510 + $0x8] sm:$0xff]
        %v1513 = vld [vmem:[%s1510 + $0x10] sm:$0xff]
        %v1514 = vld [vmem:[%s1510 + $0x18] sm:$0xff]
        %v1515 = vld [vmem:[%s1510 + $0x20] sm:$0xff]
        %v1516 = vld [vmem:[%s1510 + $0x28] sm:$0xff]
        %v1517 = vld [vmem:[%s1510 + $0x30] sm:$0xff]
        %v1518 = vld [vmem:[%s1510 + $0x38] sm:$0xff]
        %v1519 = vld [vmem:[%s1510 + $0x40] sm:$0xff]
        %v1520 = vld [vmem:[%s1510 + $0x48] sm:$0xff]
        %v1521 = vld [vmem:[%s1510 + $0x50] sm:$0xff]
        %v1522 = vld [vmem:[%s1510 + $0x58] sm:$0xff]
        %v1523 = vld [vmem:[%s1510 + $0x60] sm:$0xff]
        %v1524 = vld [vmem:[%s1510 + $0x68] sm:$0xff]
        %v1525 = vld [vmem:[%s1510 + $0x70] sm:$0xff]
        %v1526 = vld [vmem:[%s1510 + $0x78] sm:$0xff]
        %1527 = vmatprep.subr.mxu0 0.0
        %1528 = vmatpush1.msra.mxu0 %v1511
        %1529 = vmatprep.subr.mxu0 0.0
        %1530 = vmatpush1.msra.mxu0 %v1512
        %1531 = vmatprep.subr.mxu0 0.0
        %1532 = vmatpush1.msra.mxu0 %v1513
        %1533 = vmatprep.subr.mxu0 0.0
        %1534 = vmatpush1.msra.mxu0 %v1514
        %1535 = vmatprep.subr.mxu0 0.0
        %1536 = vmatpush1.msra.mxu0 %v1515
        %1537 = vmatprep.subr.mxu0 0.0
        %1538 = vmatpush1.msra.mxu0 %v1516
        %1539 = vmatprep.subr.mxu0 0.0
        %1540 = vmatpush1.msra.mxu0 %v1517
        %1541 = vmatprep.subr.mxu0 0.0
        %1542 = vmatpush1.msra.mxu0 %v1518
        %1543 = vmatprep.subr.mxu0 0.0
        %1544 = vmatpush1.msra.mxu0 %v1519
        %1545 = vmatprep.subr.mxu0 0.0
        %1546 = vmatpush1.msra.mxu0 %v1520
        %1547 = vmatprep.subr.mxu0 0.0
        %1548 = vmatpush1.msra.mxu0 %v1521
        %1549 = vmatprep.subr.mxu0 0.0
        %1550 = vmatpush1.msra.mxu0 %v1522
        %1551 = vmatprep.subr.mxu0 0.0
        %1552 = vmatpush1.msra.mxu0 %v1523
        %1553 = vmatprep.subr.mxu0 0.0
        %1554 = vmatpush1.msra.mxu0 %v1524
        %1555 = vmatprep.subr.mxu0 0.0
        %1556 = vmatpush1.msra.mxu0 %v1525
        %1557 = vmatprep.subr.mxu0 0.0
        %1558 = vmatpush1.msra.mxu0 %v1526
        %1559 = vmatprep.subr.mxu0 0.0
        %1560 = vmatpush1.msra.mxu0 0.0
        %1561 = vmatprep.subr.mxu0 0.0
        %1562 = vmatpush1.msra.mxu0 0.0
        %1563 = vmatprep.subr.mxu0 0.0
        %1564 = vmatpush1.msra.mxu0 0.0
        %1565 = vmatprep.subr.mxu0 0.0
        %1566 = vmatpush1.msra.mxu0 0.0
        %1567 = vmatprep.subr.mxu0 0.0
        %1568 = vmatpush1.msra.mxu0 0.0
        %1569 = vmatprep.subr.mxu0 0.0
        %1570 = vmatpush1.msra.mxu0 0.0
        %1571 = vmatprep.subr.mxu0 0.0
        %1572 = vmatpush1.msra.mxu0 0.0
        %1573 = vmatprep.subr.mxu0 0.0
        %1574 = vmatpush1.msra.mxu0 0.0
        %1575 = vmatprep.subr.mxu0 0.0
        %1576 = vmatpush1.msra.mxu0 0.0
        %1577 = vmatprep.subr.mxu0 0.0
        %1578 = vmatpush1.msra.mxu0 0.0
        %1579 = vmatprep.subr.mxu0 0.0
        %1580 = vmatpush1.msra.mxu0 0.0
        %1581 = vmatprep.subr.mxu0 0.0
        %1582 = vmatpush1.msra.mxu0 0.0
        %1583 = vmatprep.subr.mxu0 0.0
        %1584 = vmatpush1.msra.mxu0 0.0
        %1585 = vmatprep.subr.mxu0 0.0
        %1586 = vmatpush1.msra.mxu0 0.0
        %1587 = vmatprep.subr.mxu0 0.0
        %1588 = vmatpush1.msra.mxu0 0.0
        %1589 = vmatprep.subr.mxu0 0.0
        %1590 = vmatpush1.msra.mxu0 0.0
        %1591 = vmatprep.mubr.f32.mxu0 0.0
        %1592 = vmatmul.mubr.f32.gmra.mrb[0].mxu0 %v1332
        %v1593 = vpop.f32.mrb[0].mxu0
        %v1594 = vadd.f32 0.0, %v1593
        %v1595 = vpop.f32.mrb[0].mxu0
        %1596 = vdwg.mxu0
        %v1597 = vadd.f32 %v1507, %v1594
        %v1598 = vld [vmem:[#allocation8] sm:$0x1]
        %v1600 = vlaneseq
        %v1601 = vshrl.u32 %v1600, 7
        %v1602 = vsub.s32 0, %v1601
        %v1603 = vrot.slane %v1598, %v1602
        %v1605 = vadd.f32 %v1597, %v1603
        %vm1606 = vcmp.ge.f32.partialorder %v1605, 0.0
        %v1607 = vmul.f32 %v1605, 0.2
        %v1608 = vsel %vm1606, %v1605, %v1607
        %v1609 = vmul.f32 %v1608, %v810
        %v1610 = vadd.f32 %v1609, %v817
        %v1611 = vld [vmem:[%s10] sm:$0x3]
        %v1612 = vld [vmem:[#allocation2] sm:$0x1]
        %v1613 = vlaneseq
        %v1614 = vand.u32 %v1613, 127
        %v1615 = vmul.f32 %v1610, %v1611
        %vm1616 = vcmask 1041408
        %v1617 = vsel %vm1616, %v1615, 0.0
        %1618 = vadd.xlane.f32.xlu0 %v1617
        %v1619 = vpop.xlane.xlu0 %1618
        %v1620 = vrot.slane %v1619, 4
        %v1621 = vadd.f32 %v1619, %v1620
        %v1622 = vrot.slane %v1621, 2
        %v1623 = vadd.f32 %v1621, %v1622
        %v1624 = vrot.slane %v1623, 1
        %v1625 = vadd.f32 %v1623, %v1624
        %s1626 = vtos %v1625
        %vm1627 = vcmp.eq.s32.totalorder %v1614, 0
        %v1628 = vstv %s1626
        %v1629 = vsel %vm1627, %v1628, 0.0
        %v1630 = vadd.f32 %v1629, 0.0
        %v1631 = vadd.f32 %v1630, %v1612
        %vm1632 = vcmask 0
        %1633 = vst.msk [vmem:[%s488] sm:$0x1] %vm1632, %v1631
        %p1634 = scmp.lt.s32.totalorder %s29, 7
        %s1635 = scalar_select %p1634, %s29, 7
        %s1636 = scalar_lea.vmem %s12, %s1635
        // Predicated region
        $region93: #{discriminator_forward.1} parent=67 // pred_check
          %p1637 = pneg %p304
        $region94: #{discriminator_forward.1} parent=67 // pred_check_branch
          %1639 = sbr.rel (%p1637) target = $region96
        $region95: #{discriminator_forward.1} parent=67 // pred_region
          _
        $region96: #{discriminator_forward.1} parent=67 // pred_fallthru
          _
      $region68: #{discriminator_forward.1} parent=5 // pred_fallthru
        _
      %p1640 = scmp.le.s32.totalorder 2, %s24
      // Predicated region
      $region97: #{discriminator_forward.1} parent=5 // pred_check
        %p1641 = pneg %p1640
      $region98: #{discriminator_forward.1} parent=5 // pred_check_branch
        %1643 = sbr.rel (%p1641) target = $region100
      $region99: #{discriminator_forward.1} parent=5 // pred_region
        %s1644 = ssub.s32 %s24, 2
        // Predicated region
        $region101: #{discriminator_forward.1} parent=99 // pred_check
          %p1645 = pneg %p310
        $region102: #{discriminator_forward.1} parent=99 // pred_check_branch
          %1647 = sbr.rel (%p1645) target = $region104
        $region103: #{discriminator_forward.1} parent=99 // pred_region
          %p1648 = scmp.lt.s32.totalorder %s30, 7
          %s1649 = scalar_select %p1648, %s30, 7
          %s1650 = scalar_lea.vmem %s12, %s1649
        $region104: #{discriminator_forward.1} parent=99 // pred_fallthru
          _
      $region100: #{discriminator_forward.1} parent=5 // pred_fallthru
        _
    $region6: #{discriminator_forward.1} parent=1 // loop_footer
      %s28 = sadd.s32 1, %s24
    $region7: #{discriminator_forward.1} parent=1 // loop_footer_branch
      %23 = sbr.rel target = $region3
    $region8: #{discriminator_forward.1} parent=1 // loop_exit
      _
    %1651 = vsyncpa [#allocation4], 1
    %s1652 = scalar_lea.sflag [#allocation4], 1
    %1653 = vsyncpa %s1652, 1
    %1654 = vsyncpa [#allocation6], 1
    %1655 = vsyncpa [#allocation9], 1
    %1656 = vsyncpa [#allocation12], 1

</llo_original>
